<compile_context>
chip_gen: v7x
topology: tpu7x:2x2x1
jax: 0.10.0
libtpu: 0.0.40
codegen_flags: <defaults>
</compile_context>

<pallas_src>
import functools
import math

import jax
import jax.numpy as jnp
from jax import lax
from jax.experimental import pallas as pl
from jax.experimental.pallas import tpu as pltpu


def _pick_group_size(num_heads, d_k):
    """Largest divisor of num_heads whose group lane width G*d_k stays <= 128."""
    best = 1
    for g in range(1, num_heads + 1):
        if num_heads % g == 0 and g * d_k <= 128:
            best = g
    return best


def _pick_q_block(seq_len):
    """Query-tile length: a multiple of 128 if possible, else the full sequence."""
    for cand in (256, 128):
        if seq_len % cand == 0:
            return cand
    return seq_len


def _vmem_limit_bytes(S, Sq, D, Gd, num_groups):
    """Scoped-VMEM budget: double-buffered blocks + resident weights + temps."""
    bf16, f32 = 2, 4
    act_blocks = (2 * Sq * D * bf16          # Q tile (double-buffered)
                  + 2 * 2 * S * D * bf16     # K and V blocks (double-buffered)
                  + 2 * Sq * D * f32)        # f32 output block (double-buffered)
    weights = 2 * (3 * num_groups * D * Gd + D * D) * bf16   # resident slabs
    temps = (3 * S * Gd * f32                # qh/kh/vh group projections
             + 2 * Sq * S * f32              # scores + exp
             + 2 * Sq * D * f32)             # pv_g / contrib
    total = act_blocks + weights + temps
    return int(min(max(2 * total, 16 * 1024 * 1024), 64 * 1024 * 1024))


def _attn_group_kernel(q_ref, k_ref, v_ref, wq_ref, wk_ref, wv_ref, wo_ref,
                       o_ref, *, d_k, group_size):
    """One (batch, q_tile, head_group) grid step.

    Blocks:
      q_ref           : (1, Sq, D)          bf16 query tile
      k_ref, v_ref    : (1, S, D)           bf16 full K/V (resident per batch)
      wq/wk/wv_ref    : (nG, D, Gd)         bf16 resident (scale folded into wq)
      wo_ref          : (nG, Gd, D)         bf16 resident output-projection rows
      o_ref           : (1, Sq, D)  f32     accumulated across the group axis
    """
    g = pl.program_id(2)
    f32 = jnp.float32

    xq = q_ref[0]                  # (Sq, D) bf16
    xk = k_ref[0]                  # (S, D)
    xv = v_ref[0]
    cdt = xq.dtype                 # bf16 MXU operand dtype

    wq = wq_ref[g]                 # (D, Gd), softmax scale already folded in
    wk = wk_ref[g]
    wv = wv_ref[g]
    wo = wo_ref[g]                 # (Gd, D)

    # Group-wide projections: N = Gd (128 lanes when d_k <= 128) keeps the MXU
    # lane dimension full instead of N = d_k per head.  f32 accumulation.
    qh = jnp.dot(xq, wq, preferred_element_type=f32)   # (Sq, Gd)
    kh = jnp.dot(xk, wk, preferred_element_type=f32)   # (S,  Gd)
    vh = jnp.dot(xv, wv, preferred_element_type=f32)   # (S,  Gd)

    # TODO(synk): tile the KV axis with a flash-style online softmax for very
    # long sequences so the (Sq, S) scores are never materialized.
    pv_parts = []
    for i in range(group_size):            # static unroll over heads in group
        lo = i * d_k
        qi = qh[:, lo:lo + d_k].astype(cdt)
        ki = kh[:, lo:lo + d_k].astype(cdt)
        vi = vh[:, lo:lo + d_k].astype(cdt)

        # scores = Qi Ki^T : contract last dims (no materialized K transpose).
        s = lax.dot_general(qi, ki,
                            dimension_numbers=(((1,), (1,)), ((), ())),
                            preferred_element_type=f32)             # (Sq, S)

        # Softmax (mask == None branch) in f32; normalization is deferred.
        s = s - jnp.max(s, axis=-1, keepdims=True)
        p = jnp.exp(s)                                              # <= 1
        inv = pl.reciprocal(jnp.sum(p, axis=-1, keepdims=True), approx=True)

        pv = jnp.dot(p.astype(cdt), vi, preferred_element_type=f32)  # (Sq, d_k)
        # Deferred normalization: (Sq, d_k) multiply instead of (Sq, S).
        pv_parts.append(pv * inv)

    pv_g = pv_parts[0] if group_size == 1 else jnp.concatenate(pv_parts, axis=-1)

    # This group's slice of the output projection: one K = Gd matmul against
    # the resident W_o rows for these heads.
    contrib = jnp.dot(pv_g.astype(cdt), wo, preferred_element_type=f32)  # (Sq, D)

    # Accumulate directly into the resident output block (no f32 scratch).
    @pl.when(g == 0)
    def _():
        o_ref[0] = contrib.astype(o_ref.dtype)

    @pl.when(g != 0)
    def _():
        o_ref[0] = o_ref[0] + contrib.astype(o_ref.dtype)


def custom_attn_pallas(q, k, v, wq_t, wk_t, wv_t, wo_t, *, num_heads,
                       compute_dtype=jnp.bfloat16):
    """q, k, v: (B, S, D) float32.  w*_t: (D, D) already transposed to
    (d_in, d_out).  Returns (B, S, D) float32 (mask=None forward)."""
    B, S, D = q.shape
    assert D % num_heads == 0, "d_model must be divisible by num_heads"
    d_k = D // num_heads
    scale = 1.0 / math.sqrt(d_k)

    G = _pick_group_size(num_heads, d_k)       # heads per grid step
    num_groups = num_heads // G
    Gd = G * d_k                               # group lane width (<=128 if d_k<=128)
    Sq = _pick_q_block(S)
    num_q_tiles = S // Sq

    # Wrapper-side (free) preprocessing:
    #   - fold the 1/sqrt(d_k) softmax scale into W_q (f32, before the bf16 cast)
    #   - split projections into per-group slabs: (D, D) -> (nG, D, Gd)
    #   - split the output projection by group rows: (D, D) -> (nG, Gd, D)
    #   - cast activations / weights to bf16 for the MXU (halves HBM traffic)
    wq_g = (wq_t * scale).reshape(D, num_groups, Gd).transpose(1, 0, 2)
    wk_g = wk_t.reshape(D, num_groups, Gd).transpose(1, 0, 2)
    wv_g = wv_t.reshape(D, num_groups, Gd).transpose(1, 0, 2)
    wo_g = wo_t.reshape(num_groups, Gd, D)

    wq_g = wq_g.astype(compute_dtype)
    wk_g = wk_g.astype(compute_dtype)
    wv_g = wv_g.astype(compute_dtype)
    wo_g = wo_g.astype(compute_dtype)
    qb = q.astype(compute_dtype)
    kb = k.astype(compute_dtype)
    vb = v.astype(compute_dtype)

    kernel = functools.partial(_attn_group_kernel, d_k=d_k, group_size=G)

    q_spec = pl.BlockSpec((1, Sq, D), lambda b, t, g: (b, t, 0))
    kv_spec = pl.BlockSpec((1, S, D), lambda b, t, g: (b, 0, 0))
    # Constant block index => weights are DMA'd once and stay resident.
    wp_spec = pl.BlockSpec((num_groups, D, Gd), lambda b, t, g: (0, 0, 0))
    wo_spec = pl.BlockSpec((num_groups, Gd, D), lambda b, t, g: (0, 0, 0))
    out_spec = pl.BlockSpec((1, Sq, D), lambda b, t, g: (b, t, 0))

    return pl.pallas_call(
        kernel,
        out_shape=jax.ShapeDtypeStruct((B, S, D), jnp.float32),
        grid_spec=pltpu.PrefetchScalarGridSpec(
            num_scalar_prefetch=0,
            grid=(B, num_q_tiles, num_groups),   # head-group reduction innermost
            in_specs=[q_spec, kv_spec, kv_spec,
                      wp_spec, wp_spec, wp_spec, wo_spec],
            out_specs=out_spec,
        ),
        compiler_params=pltpu.CompilerParams(
            dimension_semantics=("parallel", "parallel", "arbitrary"),
            vmem_limit_bytes=_vmem_limit_bytes(S, Sq, D, Gd, num_groups)),
    )(qb, kb, vb, wq_g, wk_g, wv_g, wo_g)


def _reference(q, k, v, wq_t, wk_t, wv_t, wo_t, *, num_heads):
    """Pure-JAX f32 reference mirroring the PyTorch forward (mask=None, bias=False)."""
    B, S, D = q.shape
    d_k = D // num_heads

    def split(x):
        return x.reshape(B, S, num_heads, d_k).transpose(0, 2, 1, 3)

    Q = split(q @ wq_t)
    K = split(k @ wk_t)
    V = split(v @ wv_t)
    scores = jnp.einsum("bhqd,bhkd->bhqk", Q, K) / math.sqrt(d_k)
    probs = jax.nn.softmax(scores, axis=-1)
    out = jnp.einsum("bhqk,bhkd->bhqd", probs, V)
    out = out.transpose(0, 2, 1, 3).reshape(B, S, D)
    return out @ wo_t


if __name__ == "__main__":
    # Small shapes consistent with the module: d_model divisible by num_heads.
    B, S, D = 2, 8, 32
    NUM_HEADS = 4  # d_k = 8

    key = jax.random.PRNGKey(0)
    kq, kk, kv, k1, k2, k3, k4 = jax.random.split(key, 7)

    q = jax.random.normal(kq, (B, S, D), dtype=jnp.float32)
    k = jax.random.normal(kk, (B, S, D), dtype=jnp.float32)
    v = jax.random.normal(kv, (B, S, D), dtype=jnp.float32)

    # nn.Linear-like uniform(-1/sqrt(D), 1/sqrt(D)); PyTorch stores W as
    # (out, in) and computes x @ W.T, so pre-transpose to (d_in, d_out).
    bound = 1.0 / math.sqrt(D)
    wq_t = jax.random.uniform(k1, (D, D), jnp.float32, -bound, bound).T
    wk_t = jax.random.uniform(k2, (D, D), jnp.float32, -bound, bound).T
    wv_t = jax.random.uniform(k3, (D, D), jnp.float32, -bound, bound).T
    wo_t = jax.random.uniform(k4, (D, D), jnp.float32, -bound, bound).T

    out = custom_attn_pallas(q, k, v, wq_t, wk_t, wv_t, wo_t,
                             num_heads=NUM_HEADS)
    out = jax.block_until_ready(out)

    ref = _reference(q, k, v, wq_t, wk_t, wv_t, wo_t, num_heads=NUM_HEADS)
    assert out.shape == (B, S, D)
    # bf16 MXU operands + approx reciprocal vs. pure-f32 reference.
    assert jnp.allclose(out, ref, atol=2e-2, rtol=2e-2), "mismatch vs reference"

    print("KERNEL_OK")
</pallas_src>

<mosaic_0001>
module attributes {stable_mosaic.version = 11 : i64} {
  func.func @_attn_group_kernel(%arg0: i32, %arg1: i32, %arg2: i32, %arg3: memref<1x8x32xbf16, #tpu.memory_space<vmem>>, %arg4: memref<1x8x32xbf16, #tpu.memory_space<vmem>>, %arg5: memref<1x8x32xbf16, #tpu.memory_space<vmem>>, %arg6: memref<1x32x32xbf16, #tpu.memory_space<vmem>>, %arg7: memref<1x32x32xbf16, #tpu.memory_space<vmem>>, %arg8: memref<1x32x32xbf16, #tpu.memory_space<vmem>>, %arg9: memref<1x32x32xbf16, #tpu.memory_space<vmem>>, %arg10: memref<1x8x32xf32, #tpu.memory_space<vmem>>) attributes {dimension_semantics = [#tpu.dimension_semantics<parallel>, #tpu.dimension_semantics<parallel>, #tpu.dimension_semantics<arbitrary>], iteration_bounds = array<i64: 2, 1, 1>, scalar_prefetch = 0 : i64, scratch_operands = 0 : i64, tpu.core_type = #tpu.core_type<tc>, window_params = [{transform_indices = @transform_0, window_bounds = array<i64: 1, 8, 32>}, {transform_indices = @transform_1, window_bounds = array<i64: 1, 8, 32>}, {transform_indices = @transform_2, window_bounds = array<i64: 1, 8, 32>}, {pipeline_mode = #tpu.pipeline_mode<synchronous>, transform_indices = @transform_3, window_bounds = array<i64: 1, 32, 32>}, {pipeline_mode = #tpu.pipeline_mode<synchronous>, transform_indices = @transform_4, window_bounds = array<i64: 1, 32, 32>}, {pipeline_mode = #tpu.pipeline_mode<synchronous>, transform_indices = @transform_5, window_bounds = array<i64: 1, 32, 32>}, {pipeline_mode = #tpu.pipeline_mode<synchronous>, transform_indices = @transform_6, window_bounds = array<i64: 1, 32, 32>}, {transform_indices = @transform_7, window_bounds = array<i64: 1, 8, 32>}]} {
    %c0 = arith.constant 0 : index
    %c0_0 = arith.constant 0 : index
    %c0_1 = arith.constant 0 : index
    %0 = vector.load %arg3[%c0, %c0_0, %c0_1] : memref<1x8x32xbf16, #tpu.memory_space<vmem>>, vector<1x8x32xbf16>
    %1 = vector.shape_cast %0 : vector<1x8x32xbf16> to vector<8x32xbf16>
    %c0_2 = arith.constant 0 : index
    %c0_3 = arith.constant 0 : index
    %c0_4 = arith.constant 0 : index
    %2 = vector.load %arg4[%c0_2, %c0_3, %c0_4] : memref<1x8x32xbf16, #tpu.memory_space<vmem>>, vector<1x8x32xbf16>
    %3 = vector.shape_cast %2 : vector<1x8x32xbf16> to vector<8x32xbf16>
    %c0_5 = arith.constant 0 : index
    %c0_6 = arith.constant 0 : index
    %c0_7 = arith.constant 0 : index
    %4 = vector.load %arg5[%c0_5, %c0_6, %c0_7] : memref<1x8x32xbf16, #tpu.memory_space<vmem>>, vector<1x8x32xbf16>
    %5 = vector.shape_cast %4 : vector<1x8x32xbf16> to vector<8x32xbf16>
    %6 = arith.index_cast %arg2 : i32 to index
    %c0_8 = arith.constant 0 : index
    %c0_9 = arith.constant 0 : index
    %7 = vector.load %arg6[%6, %c0_8, %c0_9] : memref<1x32x32xbf16, #tpu.memory_space<vmem>>, vector<1x32x32xbf16>
    %8 = vector.shape_cast %7 : vector<1x32x32xbf16> to vector<32x32xbf16>
    %9 = arith.index_cast %arg2 : i32 to index
    %c0_10 = arith.constant 0 : index
    %c0_11 = arith.constant 0 : index
    %10 = vector.load %arg7[%9, %c0_10, %c0_11] : memref<1x32x32xbf16, #tpu.memory_space<vmem>>, vector<1x32x32xbf16>
    %11 = vector.shape_cast %10 : vector<1x32x32xbf16> to vector<32x32xbf16>
    %12 = arith.index_cast %arg2 : i32 to index
    %c0_12 = arith.constant 0 : index
    %c0_13 = arith.constant 0 : index
    %13 = vector.load %arg8[%12, %c0_12, %c0_13] : memref<1x32x32xbf16, #tpu.memory_space<vmem>>, vector<1x32x32xbf16>
    %14 = vector.shape_cast %13 : vector<1x32x32xbf16> to vector<32x32xbf16>
    %15 = arith.index_cast %arg2 : i32 to index
    %c0_14 = arith.constant 0 : index
    %c0_15 = arith.constant 0 : index
    %16 = vector.load %arg9[%15, %c0_14, %c0_15] : memref<1x32x32xbf16, #tpu.memory_space<vmem>>, vector<1x32x32xbf16>
    %17 = vector.shape_cast %16 : vector<1x32x32xbf16> to vector<32x32xbf16>
    %cst = arith.constant dense<0.000000e+00> : vector<8x32xf32>
    %18 = tpu.matmul %1, %8, %cst {dimension_numbers = #tpu.dot_dimension_numbers<[1], [0], [0], [1], [0, 0, 1, 1], [], []>} : vector<8x32xbf16>, vector<32x32xbf16>, vector<8x32xf32> -> vector<8x32xf32>
    %cst_16 = arith.constant dense<0.000000e+00> : vector<8x32xf32>
    %19 = tpu.matmul %3, %11, %cst_16 {dimension_numbers = #tpu.dot_dimension_numbers<[1], [0], [0], [1], [0, 0, 1, 1], [], []>} : vector<8x32xbf16>, vector<32x32xbf16>, vector<8x32xf32> -> vector<8x32xf32>
    %cst_17 = arith.constant dense<0.000000e+00> : vector<8x32xf32>
    %20 = tpu.matmul %5, %14, %cst_17 {dimension_numbers = #tpu.dot_dimension_numbers<[1], [0], [0], [1], [0, 0, 1, 1], [], []>} : vector<8x32xbf16>, vector<32x32xbf16>, vector<8x32xf32> -> vector<8x32xf32>
    %21 = vector.extract_strided_slice %18 {offsets = [0, 0], sizes = [8, 8], strides = [1, 1]} : vector<8x32xf32> to vector<8x8xf32>
    %22 = arith.truncf %21 : vector<8x8xf32> to vector<8x8xbf16>
    %23 = vector.extract_strided_slice %19 {offsets = [0, 0], sizes = [8, 8], strides = [1, 1]} : vector<8x32xf32> to vector<8x8xf32>
    %24 = arith.truncf %23 : vector<8x8xf32> to vector<8x8xbf16>
    %25 = vector.extract_strided_slice %20 {offsets = [0, 0], sizes = [8, 8], strides = [1, 1]} : vector<8x32xf32> to vector<8x8xf32>
    %26 = arith.truncf %25 : vector<8x8xf32> to vector<8x8xbf16>
    %cst_18 = arith.constant dense<0.000000e+00> : vector<8x8xf32>
    %27 = tpu.matmul %22, %24, %cst_18 {dimension_numbers = #tpu.dot_dimension_numbers<[1], [1], [0], [0], [0, 0, 1, 0], [], []>} : vector<8x8xbf16>, vector<8x8xbf16>, vector<8x8xf32> -> vector<8x8xf32>
    %cst_19 = arith.constant dense<0xFF800000> : vector<8xf32>
    %28 = vector.multi_reduction <maximumf>, %27, %cst_19 [1] : vector<8x8xf32> to vector<8xf32>
    %29 = vector.shape_cast %28 : vector<8xf32> to vector<8x1xf32>
    %30 = vector.broadcast %29 : vector<8x1xf32> to vector<8x8xf32>
    %31 = arith.subf %27, %30 : vector<8x8xf32>
    %32 = math.exp %31 : vector<8x8xf32>
    %cst_20 = arith.constant dense<0.000000e+00> : vector<8xf32>
    %33 = vector.multi_reduction <add>, %32, %cst_20 [1] : vector<8x8xf32> to vector<8xf32>
    %34 = vector.shape_cast %33 : vector<8xf32> to vector<8x1xf32>
    %35 = tpu.reciprocal %34 {approx = true} : vector<8x1xf32> -> vector<8x1xf32>
    %36 = arith.truncf %32 : vector<8x8xf32> to vector<8x8xbf16>
    %cst_21 = arith.constant dense<0.000000e+00> : vector<8x8xf32>
    %37 = tpu.matmul %36, %26, %cst_21 {dimension_numbers = #tpu.dot_dimension_numbers<[1], [0], [0], [1], [0, 0, 1, 1], [], []>} : vector<8x8xbf16>, vector<8x8xbf16>, vector<8x8xf32> -> vector<8x8xf32>
    %38 = vector.broadcast %35 : vector<8x1xf32> to vector<8x8xf32>
    %39 = arith.mulf %37, %38 : vector<8x8xf32>
    %40 = vector.extract_strided_slice %18 {offsets = [0, 8], sizes = [8, 8], strides = [1, 1]} : vector<8x32xf32> to vector<8x8xf32>
    %41 = arith.truncf %40 : vector<8x8xf32> to vector<8x8xbf16>
    %42 = vector.extract_strided_slice %19 {offsets = [0, 8], sizes = [8, 8], strides = [1, 1]} : vector<8x32xf32> to vector<8x8xf32>
    %43 = arith.truncf %42 : vector<8x8xf32> to vector<8x8xbf16>
    %44 = vector.extract_strided_slice %20 {offsets = [0, 8], sizes = [8, 8], strides = [1, 1]} : vector<8x32xf32> to vector<8x8xf32>
    %45 = arith.truncf %44 : vector<8x8xf32> to vector<8x8xbf16>
    %cst_22 = arith.constant dense<0.000000e+00> : vector<8x8xf32>
    %46 = tpu.matmul %41, %43, %cst_22 {dimension_numbers = #tpu.dot_dimension_numbers<[1], [1], [0], [0], [0, 0, 1, 0], [], []>} : vector<8x8xbf16>, vector<8x8xbf16>, vector<8x8xf32> -> vector<8x8xf32>
    %cst_23 = arith.constant dense<0xFF800000> : vector<8xf32>
    %47 = vector.multi_reduction <maximumf>, %46, %cst_23 [1] : vector<8x8xf32> to vector<8xf32>
    %48 = vector.shape_cast %47 : vector<8xf32> to vector<8x1xf32>
    %49 = vector.broadcast %48 : vector<8x1xf32> to vector<8x8xf32>
    %50 = arith.subf %46, %49 : vector<8x8xf32>
    %51 = math.exp %50 : vector<8x8xf32>
    %cst_24 = arith.constant dense<0.000000e+00> : vector<8xf32>
    %52 = vector.multi_reduction <add>, %51, %cst_24 [1] : vector<8x8xf32> to vector<8xf32>
    %53 = vector.shape_cast %52 : vector<8xf32> to vector<8x1xf32>
    %54 = tpu.reciprocal %53 {approx = true} : vector<8x1xf32> -> vector<8x1xf32>
    %55 = arith.truncf %51 : vector<8x8xf32> to vector<8x8xbf16>
    %cst_25 = arith.constant dense<0.000000e+00> : vector<8x8xf32>
    %56 = tpu.matmul %55, %45, %cst_25 {dimension_numbers = #tpu.dot_dimension_numbers<[1], [0], [0], [1], [0, 0, 1, 1], [], []>} : vector<8x8xbf16>, vector<8x8xbf16>, vector<8x8xf32> -> vector<8x8xf32>
    %57 = vector.broadcast %54 : vector<8x1xf32> to vector<8x8xf32>
    %58 = arith.mulf %56, %57 : vector<8x8xf32>
    %59 = vector.extract_strided_slice %18 {offsets = [0, 16], sizes = [8, 8], strides = [1, 1]} : vector<8x32xf32> to vector<8x8xf32>
    %60 = arith.truncf %59 : vector<8x8xf32> to vector<8x8xbf16>
    %61 = vector.extract_strided_slice %19 {offsets = [0, 16], sizes = [8, 8], strides = [1, 1]} : vector<8x32xf32> to vector<8x8xf32>
    %62 = arith.truncf %61 : vector<8x8xf32> to vector<8x8xbf16>
    %63 = vector.extract_strided_slice %20 {offsets = [0, 16], sizes = [8, 8], strides = [1, 1]} : vector<8x32xf32> to vector<8x8xf32>
    %64 = arith.truncf %63 : vector<8x8xf32> to vector<8x8xbf16>
    %cst_26 = arith.constant dense<0.000000e+00> : vector<8x8xf32>
    %65 = tpu.matmul %60, %62, %cst_26 {dimension_numbers = #tpu.dot_dimension_numbers<[1], [1], [0], [0], [0, 0, 1, 0], [], []>} : vector<8x8xbf16>, vector<8x8xbf16>, vector<8x8xf32> -> vector<8x8xf32>
    %cst_27 = arith.constant dense<0xFF800000> : vector<8xf32>
    %66 = vector.multi_reduction <maximumf>, %65, %cst_27 [1] : vector<8x8xf32> to vector<8xf32>
    %67 = vector.shape_cast %66 : vector<8xf32> to vector<8x1xf32>
    %68 = vector.broadcast %67 : vector<8x1xf32> to vector<8x8xf32>
    %69 = arith.subf %65, %68 : vector<8x8xf32>
    %70 = math.exp %69 : vector<8x8xf32>
    %cst_28 = arith.constant dense<0.000000e+00> : vector<8xf32>
    %71 = vector.multi_reduction <add>, %70, %cst_28 [1] : vector<8x8xf32> to vector<8xf32>
    %72 = vector.shape_cast %71 : vector<8xf32> to vector<8x1xf32>
    %73 = tpu.reciprocal %72 {approx = true} : vector<8x1xf32> -> vector<8x1xf32>
    %74 = arith.truncf %70 : vector<8x8xf32> to vector<8x8xbf16>
    %cst_29 = arith.constant dense<0.000000e+00> : vector<8x8xf32>
    %75 = tpu.matmul %74, %64, %cst_29 {dimension_numbers = #tpu.dot_dimension_numbers<[1], [0], [0], [1], [0, 0, 1, 1], [], []>} : vector<8x8xbf16>, vector<8x8xbf16>, vector<8x8xf32> -> vector<8x8xf32>
    %76 = vector.broadcast %73 : vector<8x1xf32> to vector<8x8xf32>
    %77 = arith.mulf %75, %76 : vector<8x8xf32>
    %78 = vector.extract_strided_slice %18 {offsets = [0, 24], sizes = [8, 8], strides = [1, 1]} : vector<8x32xf32> to vector<8x8xf32>
    %79 = arith.truncf %78 : vector<8x8xf32> to vector<8x8xbf16>
    %80 = vector.extract_strided_slice %19 {offsets = [0, 24], sizes = [8, 8], strides = [1, 1]} : vector<8x32xf32> to vector<8x8xf32>
    %81 = arith.truncf %80 : vector<8x8xf32> to vector<8x8xbf16>
    %82 = vector.extract_strided_slice %20 {offsets = [0, 24], sizes = [8, 8], strides = [1, 1]} : vector<8x32xf32> to vector<8x8xf32>
    %83 = arith.truncf %82 : vector<8x8xf32> to vector<8x8xbf16>
    %cst_30 = arith.constant dense<0.000000e+00> : vector<8x8xf32>
    %84 = tpu.matmul %79, %81, %cst_30 {dimension_numbers = #tpu.dot_dimension_numbers<[1], [1], [0], [0], [0, 0, 1, 0], [], []>} : vector<8x8xbf16>, vector<8x8xbf16>, vector<8x8xf32> -> vector<8x8xf32>
    %cst_31 = arith.constant dense<0xFF800000> : vector<8xf32>
    %85 = vector.multi_reduction <maximumf>, %84, %cst_31 [1] : vector<8x8xf32> to vector<8xf32>
    %86 = vector.shape_cast %85 : vector<8xf32> to vector<8x1xf32>
    %87 = vector.broadcast %86 : vector<8x1xf32> to vector<8x8xf32>
    %88 = arith.subf %84, %87 : vector<8x8xf32>
    %89 = math.exp %88 : vector<8x8xf32>
    %cst_32 = arith.constant dense<0.000000e+00> : vector<8xf32>
    %90 = vector.multi_reduction <add>, %89, %cst_32 [1] : vector<8x8xf32> to vector<8xf32>
    %91 = vector.shape_cast %90 : vector<8xf32> to vector<8x1xf32>
    %92 = tpu.reciprocal %91 {approx = true} : vector<8x1xf32> -> vector<8x1xf32>
    %93 = arith.truncf %89 : vector<8x8xf32> to vector<8x8xbf16>
    %cst_33 = arith.constant dense<0.000000e+00> : vector<8x8xf32>
    %94 = tpu.matmul %93, %83, %cst_33 {dimension_numbers = #tpu.dot_dimension_numbers<[1], [0], [0], [1], [0, 0, 1, 1], [], []>} : vector<8x8xbf16>, vector<8x8xbf16>, vector<8x8xf32> -> vector<8x8xf32>
    %95 = vector.broadcast %92 : vector<8x1xf32> to vector<8x8xf32>
    %96 = arith.mulf %94, %95 : vector<8x8xf32>
    %97 = tpu.concatenate %39, %58, %77, %96 in 1 : vector<8x8xf32>, vector<8x8xf32>, vector<8x8xf32>, vector<8x8xf32> -> vector<8x32xf32>
    %98 = arith.truncf %97 : vector<8x32xf32> to vector<8x32xbf16>
    %cst_34 = arith.constant dense<0.000000e+00> : vector<8x32xf32>
    %99 = tpu.matmul %98, %17, %cst_34 {dimension_numbers = #tpu.dot_dimension_numbers<[1], [0], [0], [1], [0, 0, 1, 1], [], []>} : vector<8x32xbf16>, vector<32x32xbf16>, vector<8x32xf32> -> vector<8x32xf32>
    %c0_i32 = arith.constant 0 : i32
    %100 = arith.cmpi eq, %arg2, %c0_i32 : i32
    %101 = arith.extui %100 : i1 to i32
    %c0_i32_35 = arith.constant 0 : i32
    %102 = arith.cmpi ne, %101, %c0_i32_35 : i32
    scf.if %102 {
      %c0_38 = arith.constant 0 : index
      %c0_39 = arith.constant 0 : index
      %c0_40 = arith.constant 0 : index
      %106 = vector.load %arg10[%c0_38, %c0_39, %c0_40] : memref<1x8x32xf32, #tpu.memory_space<vmem>>, vector<1x8x32xf32>
      %107 = vector.shape_cast %106 : vector<1x8x32xf32> to vector<8x32xf32>
      %108 = vector.shape_cast %99 : vector<8x32xf32> to vector<1x8x32xf32>
      tpu.vector_store %arg10[%c0_38, %c0_39, %c0_40], %108 {strides = array<i32>} : memref<1x8x32xf32, #tpu.memory_space<vmem>>, vector<1x8x32xf32>,
    } else {
    }
    %c0_i32_36 = arith.constant 0 : i32
    %103 = arith.cmpi ne, %arg2, %c0_i32_36 : i32
    %104 = arith.extui %103 : i1 to i32
    %c0_i32_37 = arith.constant 0 : i32
    %105 = arith.cmpi ne, %104, %c0_i32_37 : i32
    scf.if %105 {
      %c0_38 = arith.constant 0 : index
      %c0_39 = arith.constant 0 : index
      %c0_40 = arith.constant 0 : index
      %106 = vector.load %arg10[%c0_38, %c0_39, %c0_40] : memref<1x8x32xf32, #tpu.memory_space<vmem>>, vector<1x8x32xf32>
      %107 = vector.shape_cast %106 : vector<1x8x32xf32> to vector<8x32xf32>
      %108 = arith.addf %107, %99 : vector<8x32xf32>
      %c0_41 = arith.constant 0 : index
      %c0_42 = arith.constant 0 : index
      %c0_43 = arith.constant 0 : index
      %109 = vector.load %arg10[%c0_41, %c0_42, %c0_43] : memref<1x8x32xf32, #tpu.memory_space<vmem>>, vector<1x8x32xf32>
      %110 = vector.shape_cast %109 : vector<1x8x32xf32> to vector<8x32xf32>
      %111 = vector.shape_cast %108 : vector<8x32xf32> to vector<1x8x32xf32>
      tpu.vector_store %arg10[%c0_41, %c0_42, %c0_43], %111 {strides = array<i32>} : memref<1x8x32xf32, #tpu.memory_space<vmem>>, vector<1x8x32xf32>,
    } else {
    }
    return
  }
  func.func @transform_0(%arg0: i32, %arg1: i32, %arg2: i32) -> (i32, i32, i32) {
    %c0_i32 = arith.constant 0 : i32
    %c0_i32_0 = arith.constant 0 : i32
    return %arg0, %arg1, %c0_i32 : i32, i32, i32
  }
  func.func @transform_1(%arg0: i32, %arg1: i32, %arg2: i32) -> (i32, i32, i32) {
    %c0_i32 = arith.constant 0 : i32
    %c0_i32_0 = arith.constant 0 : i32
    %c0_i32_1 = arith.constant 0 : i32
    return %arg0, %c0_i32, %c0_i32_0 : i32, i32, i32
  }
  func.func @transform_2(%arg0: i32, %arg1: i32, %arg2: i32) -> (i32, i32, i32) {
    %c0_i32 = arith.constant 0 : i32
    %c0_i32_0 = arith.constant 0 : i32
    %c0_i32_1 = arith.constant 0 : i32
    return %arg0, %c0_i32, %c0_i32_0 : i32, i32, i32
  }
  func.func @transform_3(%arg0: i32, %arg1: i32, %arg2: i32) -> (i32, i32, i32) {
    %c0_i32 = arith.constant 0 : i32
    %c0_i32_0 = arith.constant 0 : i32
    %c0_i32_1 = arith.constant 0 : i32
    %c0_i32_2 = arith.constant 0 : i32
    return %c0_i32, %c0_i32_0, %c0_i32_1 : i32, i32, i32
  }
  func.func @transform_4(%arg0: i32, %arg1: i32, %arg2: i32) -> (i32, i32, i32) {
    %c0_i32 = arith.constant 0 : i32
    %c0_i32_0 = arith.constant 0 : i32
    %c0_i32_1 = arith.constant 0 : i32
    %c0_i32_2 = arith.constant 0 : i32
    return %c0_i32, %c0_i32_0, %c0_i32_1 : i32, i32, i32
  }
  func.func @transform_5(%arg0: i32, %arg1: i32, %arg2: i32) -> (i32, i32, i32) {
    %c0_i32 = arith.constant 0 : i32
    %c0_i32_0 = arith.constant 0 : i32
    %c0_i32_1 = arith.constant 0 : i32
    %c0_i32_2 = arith.constant 0 : i32
    return %c0_i32, %c0_i32_0, %c0_i32_1 : i32, i32, i32
  }
  func.func @transform_6(%arg0: i32, %arg1: i32, %arg2: i32) -> (i32, i32, i32) {
    %c0_i32 = arith.constant 0 : i32
    %c0_i32_0 = arith.constant 0 : i32
    %c0_i32_1 = arith.constant 0 : i32
    %c0_i32_2 = arith.constant 0 : i32
    return %c0_i32, %c0_i32_0, %c0_i32_1 : i32, i32, i32
  }
  func.func @transform_7(%arg0: i32, %arg1: i32, %arg2: i32) -> (i32, i32, i32) {
    %c0_i32 = arith.constant 0 : i32
    %c0_i32_0 = arith.constant 0 : i32
    return %arg0, %arg1, %c0_i32 : i32, i32, i32
  }
}

</mosaic_0001>

<llo_original>
// kernel: tpu_custom_call.1
$region0: #{tpu_custom_call.1}
  #allocation0 [shape = 'u32[]', space=smem, size = 0x4, offset = 0x4, fixed_abs, tag = 'smem constant byte address 0x4 - core index']
  #allocation1 [shape = 'u32[144,128]{1,0:T(1,128)}', space=vmem, size = 0x12000, scoped, tag = 'internal scratch']
  %s0 = inlined_call_operand.hbm [shape: bf16[2,8,32], index: 0, kind: input, shape index: {}]
  %s1 = inlined_call_operand.hbm [shape: bf16[2,8,32], index: 1, kind: input, shape index: {}]
  %s2 = inlined_call_operand.hbm [shape: bf16[2,8,32], index: 2, kind: input, shape index: {}]
  %s3 = inlined_call_operand.hbm [shape: bf16[1,32,32], index: 3, kind: input, shape index: {}]
  %s4 = inlined_call_operand.hbm [shape: bf16[1,32,32], index: 4, kind: input, shape index: {}]
  %s5 = inlined_call_operand.vmem [shape: bf16[1,32,32], index: 5, kind: input, shape index: {}]
  %s6 = inlined_call_operand.hbm [shape: bf16[1,32,32], index: 6, kind: input, shape index: {}]
  %s7 = inlined_call_operand.hbm [shape: f32[2,8,32], index: 7, kind: output, shape index: {}]
  %s8 = sld [smem:[#allocation0]]
  $region93: #{tpu_custom_call.1} parent=0
    _
  %s10 = ssub.s32 1, %s8
  %s11 = scalar_select 0, %s10, %s8
  $region1: #{tpu_custom_call.1} parent=0
    #allocation2 [shape = 'u8[4096]{0}', space=vmem, size = 0x1000, scoped, tag = 'input window, operand 0']
    #allocation3 [shape = 's32[2]{0}', space=sflag, size = 0x8, scoped, tag = 'scoped memory for tpu_custom_call.1']
    #allocation4 [shape = 's32[2]{0}', space=sflag, size = 0x8, scoped, tag = 'scoped memory for tpu_custom_call.1']
    #allocation5 [shape = 'u8[4096]{0}', space=vmem, size = 0x1000, scoped, tag = 'input window, operand 1']
    #allocation6 [shape = 's32[2]{0}', space=sflag, size = 0x8, scoped, tag = 'scoped memory for tpu_custom_call.1']
    #allocation7 [shape = 'u8[4096]{0}', space=vmem, size = 0x1000, scoped, tag = 'input window, operand 2']
    #allocation8 [shape = 'u8[8192]{0}', space=vmem, size = 0x2000, scoped, tag = 'input window, operand 3, single buffered']
    #allocation9 [shape = 's32[1]{0}', space=sflag, size = 0x4, scoped, tag = 'scoped memory for tpu_custom_call.1']
    #allocation10 [shape = 'u8[8192]{0}', space=vmem, size = 0x2000, scoped, tag = 'input window, operand 4, single buffered']
    #allocation11 [shape = 'u8[8192]{0}', space=vmem, size = 0x2000, scoped, tag = 'input window, operand 6, single buffered']
    #allocation12 [shape = 's32[1]{0}', space=sflag, size = 0x4, scoped, tag = 'scoped memory for tpu_custom_call.1']
    #allocation13 [shape = 'u8[8192]{0}', space=vmem, size = 0x2000, scoped, tag = 'output window, operand 0']
    %12 = vsyncpa [#allocation3], 0
    %s13 = scalar_lea.sflag [#allocation3], 1
    %14 = vsyncpa %s13, 0
    %15 = vsyncpa [#allocation6], 0
    %s16 = scalar_lea.sflag [#allocation6], 1
    %17 = vsyncpa %s16, 0
    %18 = vsyncpa [#allocation9], 0
    %19 = vsyncpa [#allocation12], 0
    %20 = vsyncpa [#allocation4], 0
    %s21 = scalar_lea.sflag [#allocation4], 1
    %22 = vsyncpa %s21, 0
    loop: start=0, step=1, limit=4
    $region2: #{tpu_custom_call.1} parent=1 // loop_pre_header
      _
    $region3: #{tpu_custom_call.1} parent=1 // loop_header
      %s24 = sphi 0, %s28
      %p25 = scmp.ge.s32.totalorder %s24, 4
      %s31 = sphi 0, %s50
      %s32 = sphi 0, %s46
      %s33 = sphi 0, %s42
      %s34 = sphi 0, %s31
      %s35 = sphi 0, %s32
      %s36 = sphi 0, %s33
      %s37 = sphi 0, %s34
      %s38 = sphi 0, %s35
      %s39 = sphi 0, %s36
      %s55 = sphi 0, %s57
      %s58 = sphi 0, %s55
      %s59 = sphi 0, %s58
      %s75 = sphi 0, %s59
      %s81 = sphi 0, %s83
      %s84 = sphi 0, %s81
      %s85 = sphi 0, %s84
      %s101 = sphi 0, %s85
      %s107 = sphi 0, %s109
      %s110 = sphi 0, %s107
      %s111 = sphi 0, %s110
      %s127 = sphi 0, %s111
      %s131 = sphi 0, %s131
      %s133 = sphi 0, %s131
      %s134 = sphi 0, %s133
      %s148 = sphi 0, %s134
      %s152 = sphi 0, %s152
      %s154 = sphi 0, %s152
      %s155 = sphi 0, %s154
      %s169 = sphi 0, %s155
      %s173 = sphi 0, %s173
      %s175 = sphi 0, %s173
      %s176 = sphi 0, %s175
      %s190 = sphi 0, %s176
      %s194 = sphi 0, %s194
      %s196 = sphi 0, %s194
      %s197 = sphi 0, %s196
      %s211 = sphi 0, %s197
      %s219 = sphi 0, %s221
      %s222 = sphi 0, %s219
      %s223 = sphi 0, %s222
      %s239 = sphi 0, %s223
    $region4: #{tpu_custom_call.1} parent=1 // loop_header_branch
      %27 = sbr.rel (%p25) target = $region8
    $region5: #{tpu_custom_call.1} parent=1 // loop_body
      %s29 = ssub.s32 %s24, 1
      %s30 = ssub.s32 %s24, 2
      %s40 = sadd.s32 1, %s33
      %p41 = scmp.ge.s32.totalorder %s40, 1
      %s42 = scalar_select %p41, 0, %s40
      %s43 = sadd.s32 1, %s32
      %s44 = scalar_select %p41, %s43, %s32
      %p45 = scmp.ge.s32.totalorder %s44, 1
      %s46 = scalar_select %p45, 0, %s44
      %s47 = sadd.s32 1, %s31
      %s48 = scalar_select %p45, %s47, %s31
      %p49 = scmp.ge.s32.totalorder %s48, 2
      %s50 = scalar_select %p49, 0, %s48
      %s51 = ssub.s32 %s31, %s50
      %s52 = ssub.s32 %s32, %s46
      %s53 = sor.u32 %s51, %s52
      %p54 = scmp.eq.s32.totalorder %s53, 0
      %s56 = sadd.s32 %s55, 1
      %s57 = scalar_select %p54, %s55, %s56
      %p60 = pneg %p54
      %p61 = scmp.eq.s32.totalorder %s24, 1
      %p62 = por %p60, %p61
      %p63 = scmp.ne.s32.totalorder %s55, %s58
      %p64 = scmp.eq.s32.totalorder %s24, 0
      %p65 = por %p63, %p64
      %p66 = scmp.ne.s32.totalorder %s55, %s58
      %p67 = scmp.eq.s32.totalorder %s29, 1
      %p68 = por %p66, %p67
      %p69 = scmp.ne.s32.totalorder %s58, %s59
      %p70 = scmp.eq.s32.totalorder %s29, 0
      %p71 = por %p69, %p70
      %p72 = scmp.ne.s32.totalorder %s58, %s59
      %p73 = scmp.eq.s32.totalorder %s30, 1
      %p74 = por %p72, %p73
      %p76 = scmp.ne.s32.totalorder %s59, %s75
      %p77 = scmp.eq.s32.totalorder %s30, 0
      %p78 = por %p76, %p77
      %s79 = ssub.s32 %s31, %s50
      %p80 = scmp.eq.s32.totalorder %s79, 0
      %s82 = sadd.s32 %s81, 1
      %s83 = scalar_select %p80, %s81, %s82
      %p86 = pneg %p80
      %p87 = scmp.eq.s32.totalorder %s24, 1
      %p88 = por %p86, %p87
      %p89 = scmp.ne.s32.totalorder %s81, %s84
      %p90 = scmp.eq.s32.totalorder %s24, 0
      %p91 = por %p89, %p90
      %p92 = scmp.ne.s32.totalorder %s81, %s84
      %p93 = scmp.eq.s32.totalorder %s29, 1
      %p94 = por %p92, %p93
      %p95 = scmp.ne.s32.totalorder %s84, %s85
      %p96 = scmp.eq.s32.totalorder %s29, 0
      %p97 = por %p95, %p96
      %p98 = scmp.ne.s32.totalorder %s84, %s85
      %p99 = scmp.eq.s32.totalorder %s30, 1
      %p100 = por %p98, %p99
      %p102 = scmp.ne.s32.totalorder %s85, %s101
      %p103 = scmp.eq.s32.totalorder %s30, 0
      %p104 = por %p102, %p103
      %s105 = ssub.s32 %s31, %s50
      %p106 = scmp.eq.s32.totalorder %s105, 0
      %s108 = sadd.s32 %s107, 1
      %s109 = scalar_select %p106, %s107, %s108
      %p112 = pneg %p106
      %p113 = scmp.eq.s32.totalorder %s24, 1
      %p114 = por %p112, %p113
      %p115 = scmp.ne.s32.totalorder %s107, %s110
      %p116 = scmp.eq.s32.totalorder %s24, 0
      %p117 = por %p115, %p116
      %p118 = scmp.ne.s32.totalorder %s107, %s110
      %p119 = scmp.eq.s32.totalorder %s29, 1
      %p120 = por %p118, %p119
      %p121 = scmp.ne.s32.totalorder %s110, %s111
      %p122 = scmp.eq.s32.totalorder %s29, 0
      %p123 = por %p121, %p122
      %p124 = scmp.ne.s32.totalorder %s110, %s111
      %p125 = scmp.eq.s32.totalorder %s30, 1
      %p126 = por %p124, %p125
      %p128 = scmp.ne.s32.totalorder %s111, %s127
      %p129 = scmp.eq.s32.totalorder %s30, 0
      %p130 = por %p128, %p129
      %s132 = sadd.s32 %s131, 1
      %p135 = scmp.eq.s32.totalorder %s24, 1
      %p136 = scmp.ne.s32.totalorder %s131, %s133
      %p137 = scmp.eq.s32.totalorder %s24, 0
      %p138 = por %p136, %p137
      %p139 = scmp.ne.s32.totalorder %s131, %s133
      %p140 = scmp.eq.s32.totalorder %s29, 1
      %p141 = por %p139, %p140
      %p142 = scmp.ne.s32.totalorder %s133, %s134
      %p143 = scmp.eq.s32.totalorder %s29, 0
      %p144 = por %p142, %p143
      %p145 = scmp.ne.s32.totalorder %s133, %s134
      %p146 = scmp.eq.s32.totalorder %s30, 1
      %p147 = por %p145, %p146
      %p149 = scmp.ne.s32.totalorder %s134, %s148
      %p150 = scmp.eq.s32.totalorder %s30, 0
      %p151 = por %p149, %p150
      %s153 = sadd.s32 %s152, 1
      %p156 = scmp.eq.s32.totalorder %s24, 1
      %p157 = scmp.ne.s32.totalorder %s152, %s154
      %p158 = scmp.eq.s32.totalorder %s24, 0
      %p159 = por %p157, %p158
      %p160 = scmp.ne.s32.totalorder %s152, %s154
      %p161 = scmp.eq.s32.totalorder %s29, 1
      %p162 = por %p160, %p161
      %p163 = scmp.ne.s32.totalorder %s154, %s155
      %p164 = scmp.eq.s32.totalorder %s29, 0
      %p165 = por %p163, %p164
      %p166 = scmp.ne.s32.totalorder %s154, %s155
      %p167 = scmp.eq.s32.totalorder %s30, 1
      %p168 = por %p166, %p167
      %p170 = scmp.ne.s32.totalorder %s155, %s169
      %p171 = scmp.eq.s32.totalorder %s30, 0
      %p172 = por %p170, %p171
      %s174 = sadd.s32 %s173, 1
      %p177 = scmp.eq.s32.totalorder %s24, 1
      %p178 = scmp.ne.s32.totalorder %s173, %s175
      %p179 = scmp.eq.s32.totalorder %s24, 0
      %p180 = por %p178, %p179
      %p181 = scmp.ne.s32.totalorder %s173, %s175
      %p182 = scmp.eq.s32.totalorder %s29, 1
      %p183 = por %p181, %p182
      %p184 = scmp.ne.s32.totalorder %s175, %s176
      %p185 = scmp.eq.s32.totalorder %s29, 0
      %p186 = por %p184, %p185
      %p187 = scmp.ne.s32.totalorder %s175, %s176
      %p188 = scmp.eq.s32.totalorder %s30, 1
      %p189 = por %p187, %p188
      %p191 = scmp.ne.s32.totalorder %s176, %s190
      %p192 = scmp.eq.s32.totalorder %s30, 0
      %p193 = por %p191, %p192
      %s195 = sadd.s32 %s194, 1
      %p198 = scmp.eq.s32.totalorder %s24, 1
      %p199 = scmp.ne.s32.totalorder %s194, %s196
      %p200 = scmp.eq.s32.totalorder %s24, 0
      %p201 = por %p199, %p200
      %p202 = scmp.ne.s32.totalorder %s194, %s196
      %p203 = scmp.eq.s32.totalorder %s29, 1
      %p204 = por %p202, %p203
      %p205 = scmp.ne.s32.totalorder %s196, %s197
      %p206 = scmp.eq.s32.totalorder %s29, 0
      %p207 = por %p205, %p206
      %p208 = scmp.ne.s32.totalorder %s196, %s197
      %p209 = scmp.eq.s32.totalorder %s30, 1
      %p210 = por %p208, %p209
      %p212 = scmp.ne.s32.totalorder %s197, %s211
      %p213 = scmp.eq.s32.totalorder %s30, 0
      %p214 = por %p212, %p213
      %s215 = ssub.s32 %s31, %s50
      %s216 = ssub.s32 %s32, %s46
      %s217 = sor.u32 %s215, %s216
      %p218 = scmp.eq.s32.totalorder %s217, 0
      %s220 = sadd.s32 %s219, 1
      %s221 = scalar_select %p218, %s219, %s220
      %p224 = pneg %p218
      %p225 = scmp.eq.s32.totalorder %s24, 1
      %p226 = por %p224, %p225
      %p227 = scmp.ne.s32.totalorder %s219, %s222
      %p228 = scmp.eq.s32.totalorder %s24, 0
      %p229 = por %p227, %p228
      %p230 = scmp.ne.s32.totalorder %s219, %s222
      %p231 = scmp.eq.s32.totalorder %s29, 1
      %p232 = por %p230, %p231
      %p233 = scmp.ne.s32.totalorder %s222, %s223
      %p234 = scmp.eq.s32.totalorder %s29, 0
      %p235 = por %p233, %p234
      %p236 = scmp.ne.s32.totalorder %s222, %s223
      %p237 = scmp.eq.s32.totalorder %s30, 1
      %p238 = por %p236, %p237
      %p240 = scmp.ne.s32.totalorder %s223, %s239
      %p241 = scmp.eq.s32.totalorder %s30, 0
      %p242 = por %p240, %p241
      %p243 = scmp.le.s32.totalorder 1, %s24
      %p244 = scmp.lt.s32.totalorder %s24, 3
      %p245 = pnand %p243, %p244
      %p246 = pneg %p245
      // Predicated region
      $region9: #{tpu_custom_call.1} parent=5 // pred_check
        _
      $region10: #{tpu_custom_call.1} parent=5 // pred_check_branch
        %248 = sbr.rel (%p245) target = $region12
      $region11: #{tpu_custom_call.1} parent=5 // pred_region
        %s249 = ssub.s32 %s24, 1
        // Predicated region
        $region13: #{tpu_custom_call.1} parent=11 // pred_check
          %p250 = pneg %p144
        $region14: #{tpu_custom_call.1} parent=11 // pred_check_branch
          %252 = sbr.rel (%p250) target = $region16
        $region15: #{tpu_custom_call.1} parent=11 // pred_region
          %s254 = ssub.s32 256, 256
          %255 = vsyncadd [#allocation9], %s254
          %s256 = sshll.u32 [#allocation8], 4
          %s257 = int_to_ptr.vmem [resolvable:$true] %s256
          %262 = dma.hbm_to_vmem [thread:$0]  %s3, 256, %s257, [#allocation9], 64, 64, 4
        $region16: #{tpu_custom_call.1} parent=11 // pred_fallthru
          _
        // Predicated region
        $region17: #{tpu_custom_call.1} parent=11 // pred_check
          %p263 = pneg %p165
        $region18: #{tpu_custom_call.1} parent=11 // pred_check_branch
          %265 = sbr.rel (%p263) target = $region20
        $region19: #{tpu_custom_call.1} parent=11 // pred_region
          %s267 = ssub.s32 256, 256
          %268 = vsyncadd [#allocation9], %s267
          %s269 = sshll.u32 [#allocation10], 4
          %s270 = int_to_ptr.vmem [resolvable:$true] %s269
          %275 = dma.hbm_to_vmem [thread:$0]  %s4, 256, %s270, [#allocation9], 64, 64, 4
        $region20: #{tpu_custom_call.1} parent=11 // pred_fallthru
          _
        // Predicated region
        $region21: #{tpu_custom_call.1} parent=11 // pred_check
          %p276 = pneg %p186
        $region22: #{tpu_custom_call.1} parent=11 // pred_check_branch
          %278 = sbr.rel (%p276) target = $region24
        $region23: #{tpu_custom_call.1} parent=11 // pred_region
          _
        $region24: #{tpu_custom_call.1} parent=11 // pred_fallthru
          _
        // Predicated region
        $region25: #{tpu_custom_call.1} parent=11 // pred_check
          %p279 = pneg %p207
        $region26: #{tpu_custom_call.1} parent=11 // pred_check_branch
          %281 = sbr.rel (%p279) target = $region28
        $region27: #{tpu_custom_call.1} parent=11 // pred_region
          %s283 = ssub.s32 256, 256
          %284 = vsyncadd [#allocation12], %s283
          %s285 = sshll.u32 [#allocation11], 4
          %s286 = int_to_ptr.vmem [resolvable:$true] %s285
          %291 = dma.hbm_to_vmem [thread:$0]  %s6, 256, %s286, [#allocation12], 64, 64, 4
        $region28: #{tpu_custom_call.1} parent=11 // pred_fallthru
          _
      $region12: #{tpu_custom_call.1} parent=5 // pred_fallthru
        _
      %p292 = scmp.lt.s32.totalorder %s24, 2
      // Predicated region
      $region29: #{tpu_custom_call.1} parent=5 // pred_check
        %p293 = pneg %p292
      $region30: #{tpu_custom_call.1} parent=5 // pred_check_branch
        %295 = sbr.rel (%p293) target = $region32
      $region31: #{tpu_custom_call.1} parent=5 // pred_region
        // Predicated region
        $region33: #{tpu_custom_call.1} parent=31 // pred_check
          %p296 = pneg %p65
        $region34: #{tpu_custom_call.1} parent=31 // pred_check_branch
          %298 = sbr.rel (%p296) target = $region36
        $region35: #{tpu_custom_call.1} parent=31 // pred_region
          %s299 = sand.u32 %s55, 1
          %s300 = scalar_lea.sflag [#allocation3], %s299
          %s301 = sand.u32 %s55, 1
          %s302 = smul.addr %s301, 4
          %s303 = scalar_lea.vmem [#allocation2], %s302
          %s305 = ssub.s32 64, 64
          %306 = vsyncadd %s300, %s305
          %s307 = sadd.s32 %s32, %s31
          %s308 = smul.addr %s307, 64
          %s309 = scalar_lea.hbm %s0, %s308
          %s311 = sshll.u32 %s303, 4
          %s312 = int_to_ptr.vmem [resolvable:$true] %s311
          %314 = dma.hbm_to_vmem [thread:$0]  %s309, 64, %s312, %s300
        $region36: #{tpu_custom_call.1} parent=31 // pred_fallthru
          _
        // Predicated region
        $region37: #{tpu_custom_call.1} parent=31 // pred_check
          %p315 = pneg %p91
        $region38: #{tpu_custom_call.1} parent=31 // pred_check_branch
          %317 = sbr.rel (%p315) target = $region40
        $region39: #{tpu_custom_call.1} parent=31 // pred_region
          %s318 = sand.u32 %s24, 1
          %s319 = scalar_lea.sflag [#allocation6], %s318
          %s320 = sand.u32 %s81, 1
          %s321 = smul.addr %s320, 4
          %s322 = scalar_lea.vmem [#allocation5], %s321
          %s324 = ssub.s32 64, 64
          %325 = vsyncadd %s319, %s324
          %s326 = smul.addr %s31, 64
          %s327 = scalar_lea.hbm %s1, %s326
          %s329 = sshll.u32 %s322, 4
          %s330 = int_to_ptr.vmem [resolvable:$true] %s329
          %332 = dma.hbm_to_vmem [thread:$0]  %s327, 64, %s330, %s319
        $region40: #{tpu_custom_call.1} parent=31 // pred_fallthru
          _
        // Predicated region
        $region41: #{tpu_custom_call.1} parent=31 // pred_check
          %p333 = pneg %p117
        $region42: #{tpu_custom_call.1} parent=31 // pred_check_branch
          %335 = sbr.rel (%p333) target = $region44
        $region43: #{tpu_custom_call.1} parent=31 // pred_region
          %s336 = sand.u32 %s24, 1
          %s337 = scalar_lea.sflag [#allocation6], %s336
          %s338 = sand.u32 %s107, 1
          %s339 = smul.addr %s338, 4
          %s340 = scalar_lea.vmem [#allocation7], %s339
          %s342 = ssub.s32 64, 64
          %343 = vsyncadd %s337, %s342
          %s344 = smul.addr %s31, 64
          %s345 = scalar_lea.hbm %s2, %s344
          %s347 = sshll.u32 %s340, 4
          %s348 = int_to_ptr.vmem [resolvable:$true] %s347
          %350 = dma.hbm_to_vmem [thread:$0]  %s345, 64, %s348, %s337
        $region44: #{tpu_custom_call.1} parent=31 // pred_fallthru
          _
      $region32: #{tpu_custom_call.1} parent=5 // pred_fallthru
        _
      %p351 = scmp.le.s32.totalorder 1, %s24
      %p352 = scmp.lt.s32.totalorder %s24, 3
      %p353 = pnand %p351, %p352
      %p354 = pneg %p353
      // Predicated region
      $region45: #{tpu_custom_call.1} parent=5 // pred_check
        _
      $region46: #{tpu_custom_call.1} parent=5 // pred_check_branch
        %356 = sbr.rel (%p353) target = $region48
      $region47: #{tpu_custom_call.1} parent=5 // pred_region
        %s357 = ssub.s32 %s24, 1
        %s358 = sand.u32 %s58, 1
        %s359 = scalar_lea.sflag [#allocation3], %s358
        %s360 = sand.u32 %s58, 1
        %s361 = smul.addr %s360, 4
        %s362 = scalar_lea.vmem [#allocation2], %s361
        // Predicated region
        $region49: #{tpu_custom_call.1} parent=47 // pred_check
          %p363 = pneg %p71
        $region50: #{tpu_custom_call.1} parent=47 // pred_check_branch
          %365 = sbr.rel (%p363) target = $region52
        $region51: #{tpu_custom_call.1} parent=47 // pred_region
          %366 = dma.done %s359, 64
        $region52: #{tpu_custom_call.1} parent=47 // pred_fallthru
          _
        %s367 = sand.u32 %s29, 1
        %s368 = scalar_lea.sflag [#allocation6], %s367
        %s369 = sand.u32 %s84, 1
        %s370 = smul.addr %s369, 4
        %s371 = scalar_lea.vmem [#allocation5], %s370
        // Predicated region
        $region53: #{tpu_custom_call.1} parent=47 // pred_check
          %p372 = pneg %p97
        $region54: #{tpu_custom_call.1} parent=47 // pred_check_branch
          %374 = sbr.rel (%p372) target = $region56
        $region55: #{tpu_custom_call.1} parent=47 // pred_region
          %375 = dma.done %s368, 64
        $region56: #{tpu_custom_call.1} parent=47 // pred_fallthru
          _
        %s376 = sand.u32 %s29, 1
        %s377 = scalar_lea.sflag [#allocation6], %s376
        %s378 = sand.u32 %s110, 1
        %s379 = smul.addr %s378, 4
        %s380 = scalar_lea.vmem [#allocation7], %s379
        // Predicated region
        $region57: #{tpu_custom_call.1} parent=47 // pred_check
          %p381 = pneg %p123
        $region58: #{tpu_custom_call.1} parent=47 // pred_check_branch
          %383 = sbr.rel (%p381) target = $region60
        $region59: #{tpu_custom_call.1} parent=47 // pred_region
          %384 = dma.done %s377, 64
        $region60: #{tpu_custom_call.1} parent=47 // pred_fallthru
          _
        // Predicated region
        $region61: #{tpu_custom_call.1} parent=47 // pred_check
          %p385 = pneg %p144
        $region62: #{tpu_custom_call.1} parent=47 // pred_check_branch
          %387 = sbr.rel (%p385) target = $region64
        $region63: #{tpu_custom_call.1} parent=47 // pred_region
          %388 = dma.done [#allocation9], 256
        $region64: #{tpu_custom_call.1} parent=47 // pred_fallthru
          _
        // Predicated region
        $region65: #{tpu_custom_call.1} parent=47 // pred_check
          %p389 = pneg %p165
        $region66: #{tpu_custom_call.1} parent=47 // pred_check_branch
          %391 = sbr.rel (%p389) target = $region68
        $region67: #{tpu_custom_call.1} parent=47 // pred_region
          %392 = dma.done [#allocation9], 256
        $region68: #{tpu_custom_call.1} parent=47 // pred_fallthru
          _
        // Predicated region
        $region69: #{tpu_custom_call.1} parent=47 // pred_check
          %p393 = pneg %p207
        $region70: #{tpu_custom_call.1} parent=47 // pred_check_branch
          %395 = sbr.rel (%p393) target = $region72
        $region71: #{tpu_custom_call.1} parent=47 // pred_region
          %396 = dma.done [#allocation12], 256
        $region72: #{tpu_custom_call.1} parent=47 // pred_fallthru
          _
        %s397 = sand.u32 %s58, 1
        %s398 = scalar_lea.sflag [#allocation3], %s397
        %s399 = sand.u32 %s58, 1
        %s400 = smul.addr %s399, 4
        %s401 = scalar_lea.vmem [#allocation2], %s400
        %p402 = pneg %p71
        %p403 = pneg %p68
        %s404 = sand.u32 %s29, 1
        %s405 = scalar_lea.sflag [#allocation6], %s404
        %s406 = sand.u32 %s84, 1
        %s407 = smul.addr %s406, 4
        %s408 = scalar_lea.vmem [#allocation5], %s407
        %p409 = pneg %p97
        %p410 = pneg %p94
        %s411 = sand.u32 %s29, 1
        %s412 = scalar_lea.sflag [#allocation6], %s411
        %s413 = sand.u32 %s110, 1
        %s414 = smul.addr %s413, 4
        %s415 = scalar_lea.vmem [#allocation7], %s414
        %p416 = pneg %p123
        %p417 = pneg %p120
        %p418 = pneg %p144
        %p419 = pneg %p141
        %p420 = pneg %p165
        %p421 = pneg %p162
        %p422 = pneg %p186
        %p423 = pneg %p183
        %p424 = pneg %p207
        %p425 = pneg %p204
        %p426 = pneg %p235
        %p427 = pneg %p232
        %s428 = sand.u32 %s222, 1
        %s429 = scalar_lea.sflag [#allocation4], %s428
        %s430 = sand.u32 %s222, 1
        %s431 = smul.addr %s430, 8
        %s432 = scalar_lea.vmem [#allocation13], %s431
        %v434 = vld [vmem:[%s362] sm:$0xf]
        %v435 = vld [vmem:[%s371] sm:$0xf]
        %v436 = vld [vmem:[%s380] sm:$0xf]
        %s437 = smul.u32 %s36, 4
        %s438 = smul.addr %s437, 4
        %s439 = scalar_lea.vmem [#allocation8], %s438
        %v440 = vld [vmem:[%s439] sm:$0xf]
        %v441 = vld [vmem:[%s439 + $0x4] sm:$0xf]
        %v442 = vld [vmem:[%s439 + $0x8] sm:$0xf]
        %v443 = vld [vmem:[%s439 + $0xc] sm:$0xf]
        %s444 = smul.addr %s437, 4
        %s445 = scalar_lea.vmem [#allocation10], %s444
        %v446 = vld [vmem:[%s445] sm:$0xf]
        %v447 = vld [vmem:[%s445 + $0x4] sm:$0xf]
        %v448 = vld [vmem:[%s445 + $0x8] sm:$0xf]
        %v449 = vld [vmem:[%s445 + $0xc] sm:$0xf]
        %s450 = smul.addr %s437, 4
        %s451 = scalar_lea.vmem %s5, %s450
        %v452 = vld [vmem:[%s451] sm:$0xf]
        %v453 = vld [vmem:[%s451 + $0x4] sm:$0xf]
        %v454 = vld [vmem:[%s451 + $0x8] sm:$0xf]
        %v455 = vld [vmem:[%s451 + $0xc] sm:$0xf]
        %s456 = smul.addr %s437, 4
        %s457 = scalar_lea.vmem [#allocation11], %s456
        %v458 = vld [vmem:[%s457] sm:$0xf]
        %v459 = vld [vmem:[%s457 + $0x4] sm:$0xf]
        %v460 = vld [vmem:[%s457 + $0x8] sm:$0xf]
        %v461 = vld [vmem:[%s457 + $0xc] sm:$0xf]
        %v466 = vunpack.c.l.b16 %v440
        %v467 = vunpack.c.l.b16 %v441
        %v468 = vunpack.c.l.b16 %v442
        %v469 = vunpack.c.l.b16 %v443
        %v470 = vpack.c.b16 %v467, %v466
        %v471 = vpack.c.b16 %v469, %v468
        %vm474 = vcmask 261120
        %v476 = vsel %vm474, %v434, 0
        %478 = vmatprep.subr.bf16.mxu0 0
        %479 = vmatpush1.bf16.msra.mxu0 %v470
        %480 = vmatprep.subr.bf16.mxu0 0
        %481 = vmatpush1.bf16.msra.mxu0 %v471
        %482 = vmatprep.subr.bf16.mxu0 0
        %483 = vmatpush1.bf16.msra.mxu0 0
        %484 = vmatprep.subr.bf16.mxu0 0
        %485 = vmatpush1.bf16.msra.mxu0 0
        %486 = vmatprep.subr.bf16.mxu0 0
        %487 = vmatpush1.bf16.msra.mxu0 0
        %488 = vmatprep.subr.bf16.mxu0 0
        %489 = vmatpush1.bf16.msra.mxu0 0
        %490 = vmatprep.subr.bf16.mxu0 0
        %491 = vmatpush1.bf16.msra.mxu0 0
        %492 = vmatprep.subr.bf16.mxu0 0
        %493 = vmatpush1.bf16.msra.mxu0 0
        %494 = vmatprep.subr.bf16.mxu0 0
        %495 = vmatpush1.bf16.msra.mxu0 0
        %496 = vmatprep.subr.bf16.mxu0 0
        %497 = vmatpush1.bf16.msra.mxu0 0
        %498 = vmatprep.subr.bf16.mxu0 0
        %499 = vmatpush1.bf16.msra.mxu0 0
        %500 = vmatprep.subr.bf16.mxu0 0
        %501 = vmatpush1.bf16.msra.mxu0 0
        %502 = vmatprep.subr.bf16.mxu0 0
        %503 = vmatpush1.bf16.msra.mxu0 0
        %504 = vmatprep.subr.bf16.mxu0 0
        %505 = vmatpush1.bf16.msra.mxu0 0
        %506 = vmatprep.subr.bf16.mxu0 0
        %507 = vmatpush1.bf16.msra.mxu0 0
        %508 = vmatprep.subr.bf16.mxu0 0
        %509 = vmatpush1.bf16.msra.mxu0 0
        %510 = vmatprep.mubr.bf16.mxu0 0
        %511 = vmatmul.mubr.bf16.gmra.mrb[0].mxu0 %v476
        %v512 = vpop.f32.mrb[0].mxu0
        %v513 = vadd.f32 0.0, %v512
        %v514 = vpop.f32.mrb[0].mxu0
        %v515 = vpop.f32.mrb[0].mxu0
        %v516 = vpop.f32.mrb[0].mxu0
        %517 = vdwg.mxu0
        %v522 = vunpack.c.l.b16 %v446
        %v523 = vunpack.c.l.b16 %v447
        %v524 = vunpack.c.l.b16 %v448
        %v525 = vunpack.c.l.b16 %v449
        %v526 = vpack.c.b16 %v523, %v522
        %v527 = vpack.c.b16 %v525, %v524
        %v531 = vsel %vm474, %v435, 0
        %533 = vmatprep.subr.bf16.mxu0 0
        %534 = vmatpush1.bf16.msra.mxu0 %v526
        %535 = vmatprep.subr.bf16.mxu0 0
        %536 = vmatpush1.bf16.msra.mxu0 %v527
        %537 = vmatprep.subr.bf16.mxu0 0
        %538 = vmatpush1.bf16.msra.mxu0 0
        %539 = vmatprep.subr.bf16.mxu0 0
        %540 = vmatpush1.bf16.msra.mxu0 0
        %541 = vmatprep.subr.bf16.mxu0 0
        %542 = vmatpush1.bf16.msra.mxu0 0
        %543 = vmatprep.subr.bf16.mxu0 0
        %544 = vmatpush1.bf16.msra.mxu0 0
        %545 = vmatprep.subr.bf16.mxu0 0
        %546 = vmatpush1.bf16.msra.mxu0 0
        %547 = vmatprep.subr.bf16.mxu0 0
        %548 = vmatpush1.bf16.msra.mxu0 0
        %549 = vmatprep.subr.bf16.mxu0 0
        %550 = vmatpush1.bf16.msra.mxu0 0
        %551 = vmatprep.subr.bf16.mxu0 0
        %552 = vmatpush1.bf16.msra.mxu0 0
        %553 = vmatprep.subr.bf16.mxu0 0
        %554 = vmatpush1.bf16.msra.mxu0 0
        %555 = vmatprep.subr.bf16.mxu0 0
        %556 = vmatpush1.bf16.msra.mxu0 0
        %557 = vmatprep.subr.bf16.mxu0 0
        %558 = vmatpush1.bf16.msra.mxu0 0
        %559 = vmatprep.subr.bf16.mxu0 0
        %560 = vmatpush1.bf16.msra.mxu0 0
        %561 = vmatprep.subr.bf16.mxu0 0
        %562 = vmatpush1.bf16.msra.mxu0 0
        %563 = vmatprep.subr.bf16.mxu0 0
        %564 = vmatpush1.bf16.msra.mxu0 0
        %565 = vmatprep.mubr.bf16.mxu0 0
        %566 = vmatmul.mubr.bf16.gmra.mrb[0].mxu0 %v531
        %v567 = vpop.f32.mrb[0].mxu0
        %v568 = vadd.f32 0.0, %v567
        %v569 = vpop.f32.mrb[0].mxu0
        %v570 = vpop.f32.mrb[0].mxu0
        %v571 = vpop.f32.mrb[0].mxu0
        %572 = vdwg.mxu0
        %v577 = vunpack.c.l.b16 %v452
        %v578 = vunpack.c.l.b16 %v453
        %v579 = vunpack.c.l.b16 %v454
        %v580 = vunpack.c.l.b16 %v455
        %v581 = vpack.c.b16 %v578, %v577
        %v582 = vpack.c.b16 %v580, %v579
        %v586 = vsel %vm474, %v436, 0
        %588 = vmatprep.subr.bf16.mxu0 0
        %589 = vmatpush1.bf16.msra.mxu0 %v581
        %590 = vmatprep.subr.bf16.mxu0 0
        %591 = vmatpush1.bf16.msra.mxu0 %v582
        %592 = vmatprep.subr.bf16.mxu0 0
        %593 = vmatpush1.bf16.msra.mxu0 0
        %594 = vmatprep.subr.bf16.mxu0 0
        %595 = vmatpush1.bf16.msra.mxu0 0
        %596 = vmatprep.subr.bf16.mxu0 0
        %597 = vmatpush1.bf16.msra.mxu0 0
        %598 = vmatprep.subr.bf16.mxu0 0
        %599 = vmatpush1.bf16.msra.mxu0 0
        %600 = vmatprep.subr.bf16.mxu0 0
        %601 = vmatpush1.bf16.msra.mxu0 0
        %602 = vmatprep.subr.bf16.mxu0 0
        %603 = vmatpush1.bf16.msra.mxu0 0
        %604 = vmatprep.subr.bf16.mxu0 0
        %605 = vmatpush1.bf16.msra.mxu0 0
        %606 = vmatprep.subr.bf16.mxu0 0
        %607 = vmatpush1.bf16.msra.mxu0 0
        %608 = vmatprep.subr.bf16.mxu0 0
        %609 = vmatpush1.bf16.msra.mxu0 0
        %610 = vmatprep.subr.bf16.mxu0 0
        %611 = vmatpush1.bf16.msra.mxu0 0
        %612 = vmatprep.subr.bf16.mxu0 0
        %613 = vmatpush1.bf16.msra.mxu0 0
        %614 = vmatprep.subr.bf16.mxu0 0
        %615 = vmatpush1.bf16.msra.mxu0 0
        %616 = vmatprep.subr.bf16.mxu0 0
        %617 = vmatpush1.bf16.msra.mxu0 0
        %618 = vmatprep.subr.bf16.mxu0 0
        %619 = vmatpush1.bf16.msra.mxu0 0
        %620 = vmatprep.mubr.bf16.mxu0 0
        %621 = vmatmul.mubr.bf16.gmra.mrb[0].mxu0 %v586
        %v622 = vpop.f32.mrb[0].mxu0
        %v623 = vadd.f32 0.0, %v622
        %v624 = vpop.f32.mrb[0].mxu0
        %v625 = vpop.f32.mrb[0].mxu0
        %v626 = vpop.f32.mrb[0].mxu0
        %627 = vdwg.mxu0
        %v628 = vpack.c.bf16 %v513, %v513
        %v629 = vpack.c.bf16 %v568, %v568
        %v630 = vpack.c.bf16 %v623, %v623
        %vm631 = vcmask 64512
        %v633 = vsel %vm631, %v628, 0
        %v636 = vsel %vm631, %v629, 0
        %638 = vmatprep.subr.bf16.mxu0 0
        %639 = vmatpush1.bf16.xpose.msra.mxu0 %v636
        %640 = vmatprep.subr.bf16.mxu0 0
        %641 = vmatpush1.bf16.xpose.msra.mxu0 0
        %642 = vmatprep.subr.bf16.mxu0 0
        %643 = vmatpush1.bf16.xpose.msra.mxu0 0
        %644 = vmatprep.subr.bf16.mxu0 0
        %645 = vmatpush1.bf16.xpose.msra.mxu0 0
        %646 = vmatprep.subr.bf16.mxu0 0
        %647 = vmatpush1.bf16.xpose.msra.mxu0 0
        %648 = vmatprep.subr.bf16.mxu0 0
        %649 = vmatpush1.bf16.xpose.msra.mxu0 0
        %650 = vmatprep.subr.bf16.mxu0 0
        %651 = vmatpush1.bf16.xpose.msra.mxu0 0
        %652 = vmatprep.subr.bf16.mxu0 0
        %653 = vmatpush1.bf16.xpose.msra.mxu0 0
        %654 = vmatprep.subr.bf16.mxu0 0
        %655 = vmatpush1.bf16.xpose.msra.mxu0 0
        %656 = vmatprep.subr.bf16.mxu0 0
        %657 = vmatpush1.bf16.xpose.msra.mxu0 0
        %658 = vmatprep.subr.bf16.mxu0 0
        %659 = vmatpush1.bf16.xpose.msra.mxu0 0
        %660 = vmatprep.subr.bf16.mxu0 0
        %661 = vmatpush1.bf16.xpose.msra.mxu0 0
        %662 = vmatprep.subr.bf16.mxu0 0
        %663 = vmatpush1.bf16.xpose.msra.mxu0 0
        %664 = vmatprep.subr.bf16.mxu0 0
        %665 = vmatpush1.bf16.xpose.msra.mxu0 0
        %666 = vmatprep.subr.bf16.mxu0 0
        %667 = vmatpush1.bf16.xpose.msra.mxu0 0
        %668 = vmatprep.subr.bf16.mxu0 0
        %669 = vmatpush1.bf16.xpose.msra.mxu0 0
        %670 = vmatprep.mubr.bf16.mxu0 0
        %671 = vmatmul.mubr.bf16.gmra.mrb[0].mxu0 %v633
        %v672 = vpop.f32.mrb[0].mxu0
        %v673 = vadd.f32 0.0, %v672
        %v674 = vpop.f32.mrb[0].mxu0
        %v675 = vpop.f32.mrb[0].mxu0
        %v676 = vpop.f32.mrb[0].mxu0
        %677 = vdwg.mxu0
        %v678 = vsel %vm631, %v673, -inf
        %679 = vmax.xlane.f32.xlu0 %v678
        %v680 = vpop.xlane.xlu0 %679
        %v681 = vsub.f32 %v673, %v680
        %v682 = vmul.f32 %v681, 1.442695
        %v683 = vpow.pop %v682
        %v684 = vsel %vm631, %v683, 0.0
        %685 = vadd.xlane.f32.xlu0 %v684
        %v686 = vpop.xlane.xlu0 %685
        %v687 = vrcp.pop %v686
        %v688 = vpack.c.bf16 %v683, %v683
        %v690 = vsel %vm631, %v688, 0
        %vm692 = vcmask 1043456
        %v694 = vsel %vm692, %v630, 0
        %696 = vmatprep.subr.bf16.mxu0 0
        %697 = vmatpush1.bf16.msra.mxu0 %v694
        %698 = vmatprep.subr.bf16.mxu0 0
        %699 = vmatpush1.bf16.msra.mxu0 0
        %700 = vmatprep.subr.bf16.mxu0 0
        %701 = vmatpush1.bf16.msra.mxu0 0
        %702 = vmatprep.subr.bf16.mxu0 0
        %703 = vmatpush1.bf16.msra.mxu0 0
        %704 = vmatprep.subr.bf16.mxu0 0
        %705 = vmatpush1.bf16.msra.mxu0 0
        %706 = vmatprep.subr.bf16.mxu0 0
        %707 = vmatpush1.bf16.msra.mxu0 0
        %708 = vmatprep.subr.bf16.mxu0 0
        %709 = vmatpush1.bf16.msra.mxu0 0
        %710 = vmatprep.subr.bf16.mxu0 0
        %711 = vmatpush1.bf16.msra.mxu0 0
        %712 = vmatprep.subr.bf16.mxu0 0
        %713 = vmatpush1.bf16.msra.mxu0 0
        %714 = vmatprep.subr.bf16.mxu0 0
        %715 = vmatpush1.bf16.msra.mxu0 0
        %716 = vmatprep.subr.bf16.mxu0 0
        %717 = vmatpush1.bf16.msra.mxu0 0
        %718 = vmatprep.subr.bf16.mxu0 0
        %719 = vmatpush1.bf16.msra.mxu0 0
        %720 = vmatprep.subr.bf16.mxu0 0
        %721 = vmatpush1.bf16.msra.mxu0 0
        %722 = vmatprep.subr.bf16.mxu0 0
        %723 = vmatpush1.bf16.msra.mxu0 0
        %724 = vmatprep.subr.bf16.mxu0 0
        %725 = vmatpush1.bf16.msra.mxu0 0
        %726 = vmatprep.subr.bf16.mxu0 0
        %727 = vmatpush1.bf16.msra.mxu0 0
        %728 = vmatprep.mubr.bf16.mxu0 0
        %729 = vmatmul.mubr.bf16.gmra.mrb[0].mxu0 %v690
        %v730 = vpop.f32.mrb[0].mxu0
        %v731 = vadd.f32 0.0, %v730
        %v732 = vpop.f32.mrb[0].mxu0
        %v733 = vpop.f32.mrb[0].mxu0
        %v734 = vpop.f32.mrb[0].mxu0
        %735 = vdwg.mxu0
        %v736 = vmul.f32 %v731, %v687
        %738 = vrot.lane.b32.xlu0 %v628, 120
        %v739 = vpop.permute.xlu0 %738
        %741 = vrot.lane.b32.xlu0 %v629, 120
        %v742 = vpop.permute.xlu0 %741
        %v744 = vsel %vm631, %v739, 0
        %v747 = vsel %vm631, %v742, 0
        %749 = vmatprep.subr.bf16.mxu0 0
        %750 = vmatpush1.bf16.xpose.msra.mxu0 %v747
        %751 = vmatprep.subr.bf16.mxu0 0
        %752 = vmatpush1.bf16.xpose.msra.mxu0 0
        %753 = vmatprep.subr.bf16.mxu0 0
        %754 = vmatpush1.bf16.xpose.msra.mxu0 0
        %755 = vmatprep.subr.bf16.mxu0 0
        %756 = vmatpush1.bf16.xpose.msra.mxu0 0
        %757 = vmatprep.subr.bf16.mxu0 0
        %758 = vmatpush1.bf16.xpose.msra.mxu0 0
        %759 = vmatprep.subr.bf16.mxu0 0
        %760 = vmatpush1.bf16.xpose.msra.mxu0 0
        %761 = vmatprep.subr.bf16.mxu0 0
        %762 = vmatpush1.bf16.xpose.msra.mxu0 0
        %763 = vmatprep.subr.bf16.mxu0 0
        %764 = vmatpush1.bf16.xpose.msra.mxu0 0
        %765 = vmatprep.subr.bf16.mxu0 0
        %766 = vmatpush1.bf16.xpose.msra.mxu0 0
        %767 = vmatprep.subr.bf16.mxu0 0
        %768 = vmatpush1.bf16.xpose.msra.mxu0 0
        %769 = vmatprep.subr.bf16.mxu0 0
        %770 = vmatpush1.bf16.xpose.msra.mxu0 0
        %771 = vmatprep.subr.bf16.mxu0 0
        %772 = vmatpush1.bf16.xpose.msra.mxu0 0
        %773 = vmatprep.subr.bf16.mxu0 0
        %774 = vmatpush1.bf16.xpose.msra.mxu0 0
        %775 = vmatprep.subr.bf16.mxu0 0
        %776 = vmatpush1.bf16.xpose.msra.mxu0 0
        %777 = vmatprep.subr.bf16.mxu0 0
        %778 = vmatpush1.bf16.xpose.msra.mxu0 0
        %779 = vmatprep.subr.bf16.mxu0 0
        %780 = vmatpush1.bf16.xpose.msra.mxu0 0
        %781 = vmatprep.mubr.bf16.mxu0 0
        %782 = vmatmul.mubr.bf16.gmra.mrb[0].mxu0 %v744
        %v783 = vpop.f32.mrb[0].mxu0
        %v784 = vadd.f32 0.0, %v783
        %v785 = vpop.f32.mrb[0].mxu0
        %v786 = vpop.f32.mrb[0].mxu0
        %v787 = vpop.f32.mrb[0].mxu0
        %788 = vdwg.mxu0
        %v789 = vsel %vm631, %v784, -inf
        %790 = vmax.xlane.f32.xlu0 %v789
        %v791 = vpop.xlane.xlu0 %790
        %v792 = vsub.f32 %v784, %v791
        %v793 = vmul.f32 %v792, 1.442695
        %v794 = vpow.pop %v793
        %v795 = vsel %vm631, %v794, 0.0
        %796 = vadd.xlane.f32.xlu0 %v795
        %v797 = vpop.xlane.xlu0 %796
        %v798 = vrcp.pop %v797
        %v799 = vpack.c.bf16 %v794, %v794
        %801 = vrot.lane.b32.xlu0 %v630, 120
        %v802 = vpop.permute.xlu0 %801
        %v804 = vsel %vm631, %v799, 0
        %v807 = vsel %vm692, %v802, 0
        %809 = vmatprep.subr.bf16.mxu0 0
        %810 = vmatpush1.bf16.msra.mxu0 %v807
        %811 = vmatprep.subr.bf16.mxu0 0
        %812 = vmatpush1.bf16.msra.mxu0 0
        %813 = vmatprep.subr.bf16.mxu0 0
        %814 = vmatpush1.bf16.msra.mxu0 0
        %815 = vmatprep.subr.bf16.mxu0 0
        %816 = vmatpush1.bf16.msra.mxu0 0
        %817 = vmatprep.subr.bf16.mxu0 0
        %818 = vmatpush1.bf16.msra.mxu0 0
        %819 = vmatprep.subr.bf16.mxu0 0
        %820 = vmatpush1.bf16.msra.mxu0 0
        %821 = vmatprep.subr.bf16.mxu0 0
        %822 = vmatpush1.bf16.msra.mxu0 0
        %823 = vmatprep.subr.bf16.mxu0 0
        %824 = vmatpush1.bf16.msra.mxu0 0
        %825 = vmatprep.subr.bf16.mxu0 0
        %826 = vmatpush1.bf16.msra.mxu0 0
        %827 = vmatprep.subr.bf16.mxu0 0
        %828 = vmatpush1.bf16.msra.mxu0 0
        %829 = vmatprep.subr.bf16.mxu0 0
        %830 = vmatpush1.bf16.msra.mxu0 0
        %831 = vmatprep.subr.bf16.mxu0 0
        %832 = vmatpush1.bf16.msra.mxu0 0
        %833 = vmatprep.subr.bf16.mxu0 0
        %834 = vmatpush1.bf16.msra.mxu0 0
        %835 = vmatprep.subr.bf16.mxu0 0
        %836 = vmatpush1.bf16.msra.mxu0 0
        %837 = vmatprep.subr.bf16.mxu0 0
        %838 = vmatpush1.bf16.msra.mxu0 0
        %839 = vmatprep.subr.bf16.mxu0 0
        %840 = vmatpush1.bf16.msra.mxu0 0
        %841 = vmatprep.mubr.bf16.mxu0 0
        %842 = vmatmul.mubr.bf16.gmra.mrb[0].mxu0 %v804
        %v843 = vpop.f32.mrb[0].mxu0
        %v844 = vadd.f32 0.0, %v843
        %v845 = vpop.f32.mrb[0].mxu0
        %v846 = vpop.f32.mrb[0].mxu0
        %v847 = vpop.f32.mrb[0].mxu0
        %848 = vdwg.mxu0
        %v849 = vmul.f32 %v844, %v798
        %850 = vrot.lane.b32.xlu0 %v628, 112
        %v851 = vpop.permute.xlu0 %850
        %852 = vrot.lane.b32.xlu0 %v629, 112
        %v853 = vpop.permute.xlu0 %852
        %v855 = vsel %vm631, %v851, 0
        %v858 = vsel %vm631, %v853, 0
        %860 = vmatprep.subr.bf16.mxu0 0
        %861 = vmatpush1.bf16.xpose.msra.mxu0 %v858
        %862 = vmatprep.subr.bf16.mxu0 0
        %863 = vmatpush1.bf16.xpose.msra.mxu0 0
        %864 = vmatprep.subr.bf16.mxu0 0
        %865 = vmatpush1.bf16.xpose.msra.mxu0 0
        %866 = vmatprep.subr.bf16.mxu0 0
        %867 = vmatpush1.bf16.xpose.msra.mxu0 0
        %868 = vmatprep.subr.bf16.mxu0 0
        %869 = vmatpush1.bf16.xpose.msra.mxu0 0
        %870 = vmatprep.subr.bf16.mxu0 0
        %871 = vmatpush1.bf16.xpose.msra.mxu0 0
        %872 = vmatprep.subr.bf16.mxu0 0
        %873 = vmatpush1.bf16.xpose.msra.mxu0 0
        %874 = vmatprep.subr.bf16.mxu0 0
        %875 = vmatpush1.bf16.xpose.msra.mxu0 0
        %876 = vmatprep.subr.bf16.mxu0 0
        %877 = vmatpush1.bf16.xpose.msra.mxu0 0
        %878 = vmatprep.subr.bf16.mxu0 0
        %879 = vmatpush1.bf16.xpose.msra.mxu0 0
        %880 = vmatprep.subr.bf16.mxu0 0
        %881 = vmatpush1.bf16.xpose.msra.mxu0 0
        %882 = vmatprep.subr.bf16.mxu0 0
        %883 = vmatpush1.bf16.xpose.msra.mxu0 0
        %884 = vmatprep.subr.bf16.mxu0 0
        %885 = vmatpush1.bf16.xpose.msra.mxu0 0
        %886 = vmatprep.subr.bf16.mxu0 0
        %887 = vmatpush1.bf16.xpose.msra.mxu0 0
        %888 = vmatprep.subr.bf16.mxu0 0
        %889 = vmatpush1.bf16.xpose.msra.mxu0 0
        %890 = vmatprep.subr.bf16.mxu0 0
        %891 = vmatpush1.bf16.xpose.msra.mxu0 0
        %892 = vmatprep.mubr.bf16.mxu0 0
        %893 = vmatmul.mubr.bf16.gmra.mrb[0].mxu0 %v855
        %v894 = vpop.f32.mrb[0].mxu0
        %v895 = vadd.f32 0.0, %v894
        %v896 = vpop.f32.mrb[0].mxu0
        %v897 = vpop.f32.mrb[0].mxu0
        %v898 = vpop.f32.mrb[0].mxu0
        %899 = vdwg.mxu0
        %v900 = vsel %vm631, %v895, -inf
        %901 = vmax.xlane.f32.xlu0 %v900
        %v902 = vpop.xlane.xlu0 %901
        %v903 = vsub.f32 %v895, %v902
        %v904 = vmul.f32 %v903, 1.442695
        %v905 = vpow.pop %v904
        %v906 = vsel %vm631, %v905, 0.0
        %907 = vadd.xlane.f32.xlu0 %v906
        %v908 = vpop.xlane.xlu0 %907
        %v909 = vrcp.pop %v908
        %v910 = vpack.c.bf16 %v905, %v905
        %911 = vrot.lane.b32.xlu0 %v630, 112
        %v912 = vpop.permute.xlu0 %911
        %v914 = vsel %vm631, %v910, 0
        %v917 = vsel %vm692, %v912, 0
        %919 = vmatprep.subr.bf16.mxu0 0
        %920 = vmatpush1.bf16.msra.mxu0 %v917
        %921 = vmatprep.subr.bf16.mxu0 0
        %922 = vmatpush1.bf16.msra.mxu0 0
        %923 = vmatprep.subr.bf16.mxu0 0
        %924 = vmatpush1.bf16.msra.mxu0 0
        %925 = vmatprep.subr.bf16.mxu0 0
        %926 = vmatpush1.bf16.msra.mxu0 0
        %927 = vmatprep.subr.bf16.mxu0 0
        %928 = vmatpush1.bf16.msra.mxu0 0
        %929 = vmatprep.subr.bf16.mxu0 0
        %930 = vmatpush1.bf16.msra.mxu0 0
        %931 = vmatprep.subr.bf16.mxu0 0
        %932 = vmatpush1.bf16.msra.mxu0 0
        %933 = vmatprep.subr.bf16.mxu0 0
        %934 = vmatpush1.bf16.msra.mxu0 0
        %935 = vmatprep.subr.bf16.mxu0 0
        %936 = vmatpush1.bf16.msra.mxu0 0
        %937 = vmatprep.subr.bf16.mxu0 0
        %938 = vmatpush1.bf16.msra.mxu0 0
        %939 = vmatprep.subr.bf16.mxu0 0
        %940 = vmatpush1.bf16.msra.mxu0 0
        %941 = vmatprep.subr.bf16.mxu0 0
        %942 = vmatpush1.bf16.msra.mxu0 0
        %943 = vmatprep.subr.bf16.mxu0 0
        %944 = vmatpush1.bf16.msra.mxu0 0
        %945 = vmatprep.subr.bf16.mxu0 0
        %946 = vmatpush1.bf16.msra.mxu0 0
        %947 = vmatprep.subr.bf16.mxu0 0
        %948 = vmatpush1.bf16.msra.mxu0 0
        %949 = vmatprep.subr.bf16.mxu0 0
        %950 = vmatpush1.bf16.msra.mxu0 0
        %951 = vmatprep.mubr.bf16.mxu0 0
        %952 = vmatmul.mubr.bf16.gmra.mrb[0].mxu0 %v914
        %v953 = vpop.f32.mrb[0].mxu0
        %v954 = vadd.f32 0.0, %v953
        %v955 = vpop.f32.mrb[0].mxu0
        %v956 = vpop.f32.mrb[0].mxu0
        %v957 = vpop.f32.mrb[0].mxu0
        %958 = vdwg.mxu0
        %v959 = vmul.f32 %v954, %v909
        %960 = vrot.lane.b32.xlu0 %v628, 104
        %v961 = vpop.permute.xlu0 %960
        %962 = vrot.lane.b32.xlu0 %v629, 104
        %v963 = vpop.permute.xlu0 %962
        %v965 = vsel %vm631, %v961, 0
        %v968 = vsel %vm631, %v963, 0
        %970 = vmatprep.subr.bf16.mxu0 0
        %971 = vmatpush1.bf16.xpose.msra.mxu0 %v968
        %972 = vmatprep.subr.bf16.mxu0 0
        %973 = vmatpush1.bf16.xpose.msra.mxu0 0
        %974 = vmatprep.subr.bf16.mxu0 0
        %975 = vmatpush1.bf16.xpose.msra.mxu0 0
        %976 = vmatprep.subr.bf16.mxu0 0
        %977 = vmatpush1.bf16.xpose.msra.mxu0 0
        %978 = vmatprep.subr.bf16.mxu0 0
        %979 = vmatpush1.bf16.xpose.msra.mxu0 0
        %980 = vmatprep.subr.bf16.mxu0 0
        %981 = vmatpush1.bf16.xpose.msra.mxu0 0
        %982 = vmatprep.subr.bf16.mxu0 0
        %983 = vmatpush1.bf16.xpose.msra.mxu0 0
        %984 = vmatprep.subr.bf16.mxu0 0
        %985 = vmatpush1.bf16.xpose.msra.mxu0 0
        %986 = vmatprep.subr.bf16.mxu0 0
        %987 = vmatpush1.bf16.xpose.msra.mxu0 0
        %988 = vmatprep.subr.bf16.mxu0 0
        %989 = vmatpush1.bf16.xpose.msra.mxu0 0
        %990 = vmatprep.subr.bf16.mxu0 0
        %991 = vmatpush1.bf16.xpose.msra.mxu0 0
        %992 = vmatprep.subr.bf16.mxu0 0
        %993 = vmatpush1.bf16.xpose.msra.mxu0 0
        %994 = vmatprep.subr.bf16.mxu0 0
        %995 = vmatpush1.bf16.xpose.msra.mxu0 0
        %996 = vmatprep.subr.bf16.mxu0 0
        %997 = vmatpush1.bf16.xpose.msra.mxu0 0
        %998 = vmatprep.subr.bf16.mxu0 0
        %999 = vmatpush1.bf16.xpose.msra.mxu0 0
        %1000 = vmatprep.subr.bf16.mxu0 0
        %1001 = vmatpush1.bf16.xpose.msra.mxu0 0
        %1002 = vmatprep.mubr.bf16.mxu0 0
        %1003 = vmatmul.mubr.bf16.gmra.mrb[0].mxu0 %v965
        %v1004 = vpop.f32.mrb[0].mxu0
        %v1005 = vadd.f32 0.0, %v1004
        %v1006 = vpop.f32.mrb[0].mxu0
        %v1007 = vpop.f32.mrb[0].mxu0
        %v1008 = vpop.f32.mrb[0].mxu0
        %1009 = vdwg.mxu0
        %v1010 = vsel %vm631, %v1005, -inf
        %1011 = vmax.xlane.f32.xlu0 %v1010
        %v1012 = vpop.xlane.xlu0 %1011
        %v1013 = vsub.f32 %v1005, %v1012
        %v1014 = vmul.f32 %v1013, 1.442695
        %v1015 = vpow.pop %v1014
        %v1016 = vsel %vm631, %v1015, 0.0
        %1017 = vadd.xlane.f32.xlu0 %v1016
        %v1018 = vpop.xlane.xlu0 %1017
        %v1019 = vrcp.pop %v1018
        %v1020 = vpack.c.bf16 %v1015, %v1015
        %1021 = vrot.lane.b32.xlu0 %v630, 104
        %v1022 = vpop.permute.xlu0 %1021
        %v1024 = vsel %vm631, %v1020, 0
        %v1027 = vsel %vm692, %v1022, 0
        %1029 = vmatprep.subr.bf16.mxu0 0
        %1030 = vmatpush1.bf16.msra.mxu0 %v1027
        %1031 = vmatprep.subr.bf16.mxu0 0
        %1032 = vmatpush1.bf16.msra.mxu0 0
        %1033 = vmatprep.subr.bf16.mxu0 0
        %1034 = vmatpush1.bf16.msra.mxu0 0
        %1035 = vmatprep.subr.bf16.mxu0 0
        %1036 = vmatpush1.bf16.msra.mxu0 0
        %1037 = vmatprep.subr.bf16.mxu0 0
        %1038 = vmatpush1.bf16.msra.mxu0 0
        %1039 = vmatprep.subr.bf16.mxu0 0
        %1040 = vmatpush1.bf16.msra.mxu0 0
        %1041 = vmatprep.subr.bf16.mxu0 0
        %1042 = vmatpush1.bf16.msra.mxu0 0
        %1043 = vmatprep.subr.bf16.mxu0 0
        %1044 = vmatpush1.bf16.msra.mxu0 0
        %1045 = vmatprep.subr.bf16.mxu0 0
        %1046 = vmatpush1.bf16.msra.mxu0 0
        %1047 = vmatprep.subr.bf16.mxu0 0
        %1048 = vmatpush1.bf16.msra.mxu0 0
        %1049 = vmatprep.subr.bf16.mxu0 0
        %1050 = vmatpush1.bf16.msra.mxu0 0
        %1051 = vmatprep.subr.bf16.mxu0 0
        %1052 = vmatpush1.bf16.msra.mxu0 0
        %1053 = vmatprep.subr.bf16.mxu0 0
        %1054 = vmatpush1.bf16.msra.mxu0 0
        %1055 = vmatprep.subr.bf16.mxu0 0
        %1056 = vmatpush1.bf16.msra.mxu0 0
        %1057 = vmatprep.subr.bf16.mxu0 0
        %1058 = vmatpush1.bf16.msra.mxu0 0
        %1059 = vmatprep.subr.bf16.mxu0 0
        %1060 = vmatpush1.bf16.msra.mxu0 0
        %1061 = vmatprep.mubr.bf16.mxu0 0
        %1062 = vmatmul.mubr.bf16.gmra.mrb[0].mxu0 %v1024
        %v1063 = vpop.f32.mrb[0].mxu0
        %v1064 = vadd.f32 0.0, %v1063
        %v1065 = vpop.f32.mrb[0].mxu0
        %v1066 = vpop.f32.mrb[0].mxu0
        %v1067 = vpop.f32.mrb[0].mxu0
        %1068 = vdwg.mxu0
        %v1069 = vmul.f32 %v1064, %v1019
        %1071 = vrot.lane.b32.xlu0 %v849, 8
        %v1072 = vpop.permute.xlu0 %1071
        %1075 = vrot.lane.b32.xlu0 %v959, 16
        %v1076 = vpop.permute.xlu0 %1075
        %1079 = vrot.lane.b32.xlu0 %v1069, 24
        %v1080 = vpop.permute.xlu0 %1079
        %v1082 = vsel %vm631, %v736, %v1072
        %vm1083 = vcmask 130048
        %v1084 = vsel %vm1083, %v1082, %v1076
        %vm1085 = vcmask 195584
        %v1086 = vsel %vm1085, %v1084, %v1080
        %v1087 = vpack.c.bf16 %v1086, %v1086
        %v1092 = vunpack.c.l.b16 %v458
        %v1093 = vunpack.c.l.b16 %v459
        %v1094 = vunpack.c.l.b16 %v460
        %v1095 = vunpack.c.l.b16 %v461
        %v1096 = vpack.c.b16 %v1093, %v1092
        %v1097 = vpack.c.b16 %v1095, %v1094
        %v1101 = vsel %vm474, %v1087, 0
        %1103 = vmatprep.subr.bf16.mxu0 0
        %1104 = vmatpush1.bf16.msra.mxu0 %v1096
        %1105 = vmatprep.subr.bf16.mxu0 0
        %1106 = vmatpush1.bf16.msra.mxu0 %v1097
        %1107 = vmatprep.subr.bf16.mxu0 0
        %1108 = vmatpush1.bf16.msra.mxu0 0
        %1109 = vmatprep.subr.bf16.mxu0 0
        %1110 = vmatpush1.bf16.msra.mxu0 0
        %1111 = vmatprep.subr.bf16.mxu0 0
        %1112 = vmatpush1.bf16.msra.mxu0 0
        %1113 = vmatprep.subr.bf16.mxu0 0
        %1114 = vmatpush1.bf16.msra.mxu0 0
        %1115 = vmatprep.subr.bf16.mxu0 0
        %1116 = vmatpush1.bf16.msra.mxu0 0
        %1117 = vmatprep.subr.bf16.mxu0 0
        %1118 = vmatpush1.bf16.msra.mxu0 0
        %1119 = vmatprep.subr.bf16.mxu0 0
        %1120 = vmatpush1.bf16.msra.mxu0 0
        %1121 = vmatprep.subr.bf16.mxu0 0
        %1122 = vmatpush1.bf16.msra.mxu0 0
        %1123 = vmatprep.subr.bf16.mxu0 0
        %1124 = vmatpush1.bf16.msra.mxu0 0
        %1125 = vmatprep.subr.bf16.mxu0 0
        %1126 = vmatpush1.bf16.msra.mxu0 0
        %1127 = vmatprep.subr.bf16.mxu0 0
        %1128 = vmatpush1.bf16.msra.mxu0 0
        %1129 = vmatprep.subr.bf16.mxu0 0
        %1130 = vmatpush1.bf16.msra.mxu0 0
        %1131 = vmatprep.subr.bf16.mxu0 0
        %1132 = vmatpush1.bf16.msra.mxu0 0
        %1133 = vmatprep.subr.bf16.mxu0 0
        %1134 = vmatpush1.bf16.msra.mxu0 0
        %1135 = vmatprep.mubr.bf16.mxu0 0
        %1136 = vmatmul.mubr.bf16.gmra.mrb[0].mxu0 %v1101
        %v1137 = vpop.f32.mrb[0].mxu0
        %v1138 = vadd.f32 0.0, %v1137
        %v1139 = vpop.f32.mrb[0].mxu0
        %v1140 = vpop.f32.mrb[0].mxu0
        %v1141 = vpop.f32.mrb[0].mxu0
        %1142 = vdwg.mxu0
        %p1143 = scmp.eq.s32.totalorder %s36, 0
        // Predicated region
        $region73: #{tpu_custom_call.1} parent=47 // pred_check
          %p1144 = pneg %p1143
        $region74: #{tpu_custom_call.1} parent=47 // pred_check_branch
          %1146 = sbr.rel (%p1144) target = $region76
        $region75: #{tpu_custom_call.1} parent=47 // pred_region
          %1147 = vst.msk [vmem:[%s432] sm:$0xff] %vm474, %v1138
        $region76: #{tpu_custom_call.1} parent=47 // pred_fallthru
          _
        %p1148 = scmp.ne.s32.totalorder %s36, 0
        // Predicated region
        $region77: #{tpu_custom_call.1} parent=47 // pred_check
          %p1149 = pneg %p1148
        $region78: #{tpu_custom_call.1} parent=47 // pred_check_branch
          %1151 = sbr.rel (%p1149) target = $region80
        $region79: #{tpu_custom_call.1} parent=47 // pred_region
          %v1152 = vld [vmem:[%s432] sm:$0xff]
          %v1153 = vadd.f32 %v1152, %v1138
          %1154 = vst.msk [vmem:[%s432] sm:$0xff] %vm474, %v1153
        $region80: #{tpu_custom_call.1} parent=47 // pred_fallthru
          _
        %s1155 = sand.u32 %s222, 1
        %s1156 = scalar_lea.sflag [#allocation4], %s1155
        %s1157 = sand.u32 %s222, 1
        %s1158 = smul.addr %s1157, 8
        %s1159 = scalar_lea.vmem [#allocation13], %s1158
        // Predicated region
        $region81: #{tpu_custom_call.1} parent=47 // pred_check
          %p1160 = pneg %p232
        $region82: #{tpu_custom_call.1} parent=47 // pred_check_branch
          %1162 = sbr.rel (%p1160) target = $region84
        $region83: #{tpu_custom_call.1} parent=47 // pred_region
          %s1164 = ssub.s32 128, 128
          %1165 = vsyncadd %s1156, %s1164
          %s1166 = sadd.s32 %s35, %s34
          %s1167 = smul.addr %s1166, 128
          %s1168 = scalar_lea.hbm %s7, %s1167
          %s1170 = sshll.u32 %s1159, 4
          %s1171 = int_to_ptr.vmem [resolvable:$true] %s1170
          %1173 = dma.vmem_to_hbm [thread:$0]  %s1171, 128, %s1168, %s1156
        $region84: #{tpu_custom_call.1} parent=47 // pred_fallthru
          _
      $region48: #{tpu_custom_call.1} parent=5 // pred_fallthru
        _
      %p1174 = scmp.le.s32.totalorder 2, %s24
      // Predicated region
      $region85: #{tpu_custom_call.1} parent=5 // pred_check
        %p1175 = pneg %p1174
      $region86: #{tpu_custom_call.1} parent=5 // pred_check_branch
        %1177 = sbr.rel (%p1175) target = $region88
      $region87: #{tpu_custom_call.1} parent=5 // pred_region
        %s1178 = ssub.s32 %s24, 2
        // Predicated region
        $region89: #{tpu_custom_call.1} parent=87 // pred_check
          %p1179 = pneg %p238
        $region90: #{tpu_custom_call.1} parent=87 // pred_check_branch
          %1181 = sbr.rel (%p1179) target = $region92
        $region91: #{tpu_custom_call.1} parent=87 // pred_region
          %s1182 = sand.u32 %s223, 1
          %s1183 = scalar_lea.sflag [#allocation4], %s1182
          %s1184 = sand.u32 %s223, 1
          %s1185 = smul.addr %s1184, 8
          %s1186 = scalar_lea.vmem [#allocation13], %s1185
          %1187 = dma.done %s1183, 128
        $region92: #{tpu_custom_call.1} parent=87 // pred_fallthru
          _
      $region88: #{tpu_custom_call.1} parent=5 // pred_fallthru
        _
    $region6: #{tpu_custom_call.1} parent=1 // loop_footer
      %s28 = sadd.s32 1, %s24
    $region7: #{tpu_custom_call.1} parent=1 // loop_footer_branch
      %23 = sbr.rel target = $region3
    $region8: #{tpu_custom_call.1} parent=1 // loop_exit
      _
    %1188 = vsyncpa [#allocation3], 1
    %s1189 = scalar_lea.sflag [#allocation3], 1
    %1190 = vsyncpa %s1189, 1
    %1191 = vsyncpa [#allocation6], 1
    %s1192 = scalar_lea.sflag [#allocation6], 1
    %1193 = vsyncpa %s1192, 1
    %1194 = vsyncpa [#allocation9], 1
    %1195 = vsyncpa [#allocation12], 1
    %1196 = vsyncpa [#allocation4], 1
    %s1197 = scalar_lea.sflag [#allocation4], 1
    %1198 = vsyncpa %s1197, 1

</llo_original>
